<compile_context>
chip_gen: v5e
topology: v5e:2x2
jax: 0.10.0
libtpu: 0.0.40
codegen_flags: <defaults>
</compile_context>

<pallas_src>
import functools
import math

import jax
import jax.numpy as jnp
from jax import lax
from jax.experimental import pallas as pl
from jax.experimental.pallas import tpu as pltpu


# ---------------------------------------------------------------------------
# Pallas conv kernel: one fused MXU dot (K = 9*ct) per (batch, Cout-tile, Cin-tile)
# grid step, taps built in VMEM with flat-shifted lane slices (no HBM im2col).
# ---------------------------------------------------------------------------
def _arc_conv_kernel(w_ref, x_ref, o_ref, acc_ref, *, H, W, Wp):
    # w_ref:   (1, co_t, ct*9)      bf16   k index = ci*9 + tap, tap = ky*3 + kx
    # x_ref:   (1, ct, Hp*Wp + 2)   bf16   flattened zero-padded activations
    # o_ref:   (1, co_t, H*W)       out dtype (lane-dense)
    # acc_ref: (co_t, H*Wp)         f32    accumulator (junk cols c>=W sliced at store)
    ci = pl.program_id(2)
    L = H * Wp

    x_flat = x_ref[0]                                       # (ct, F)
    ct = x_flat.shape[0]
    # Flat-shift im2col built in VMEM: each tap is a lane-offset slice of x_flat.
    taps = [x_flat[:, ky * Wp + kx: ky * Wp + kx + L]
            for ky in range(3) for kx in range(3)]          # 9 x (ct, L)
    xk = jnp.stack(taps, axis=1).reshape(ct * 9, L)         # (ct*9, L), channel-major

    # Single fused MXU dot with f32 accumulation.
    part = jnp.dot(w_ref[0], xk, preferred_element_type=jnp.float32)   # (co_t, L)

    @pl.when(ci == 0)
    def _init():
        acc_ref[...] = part

    @pl.when(ci > 0)
    def _accum():
        acc_ref[...] += part

    @pl.when(ci == pl.num_programs(2) - 1)
    def _store():
        acc = acc_ref[...]
        co_t = acc.shape[0]
        valid = acc.reshape(co_t, H, Wp)[:, :, :W].reshape(co_t, H * W)
        o_ref[0] = valid.astype(o_ref.dtype)


# ---------------------------------------------------------------------------
# Generation-aware VMEM budget + honest (lane/sublane padded) byte model.
# ---------------------------------------------------------------------------
def _round_up(v, m):
    return ((v + m - 1) // m) * m


def _vmem_budget():
    cap = 64 * 1024 * 1024
    try:
        info = pltpu.get_tpu_info()
        cap = int(getattr(info, "vmem_capacity_bytes", cap))
    except Exception:
        pass
    if cap <= 64 * 1024 * 1024:                 # v7x-class: 64 MiB VMEM per core
        return 40 * 1024 * 1024, 48 * 1024 * 1024
    return 80 * 1024 * 1024, 100 * 1024 * 1024  # v5e / v6e: 128 MiB physical


def _vmem_bytes(co_t, ct, F, L, HW, out_isz):
    lane, sub16, sub32 = 128, 16, 8
    x_blk = _round_up(ct, sub16) * _round_up(F, lane) * 2          # bf16 activation block
    w_blk = _round_up(co_t, sub16) * _round_up(ct * 9, lane) * 2   # bf16 weight block
    o_sub = sub32 if out_isz == 4 else sub16
    o_blk = _round_up(co_t, o_sub) * _round_up(HW, lane) * out_isz
    acc = _round_up(co_t, sub32) * _round_up(L, lane) * 4          # f32 accumulator
    xk = _round_up(ct * 9, sub16) * _round_up(L, lane) * 2         # fused-K operand
    xk_tmp = _round_up(ct, sub16) * 16 * _round_up(L, lane) * 2    # (ct,9,L) staging
    dot_out = _round_up(co_t, sub32) * _round_up(L, lane) * 4
    store_tmp = acc                                                # reshape/slice temporaries
    return 2 * (x_blk + w_blk + o_blk) + acc + xk + xk_tmp + dot_out + store_tmp


def _choose_tiles(Cout, Cin, F, L, HW, out_isz, budget):
    # Cin tiles: full Cin first (activation streams once per batch), then 128-multiples.
    ct_cands = [Cin]
    for t in range((Cin // 128) * 128, 0, -128):
        if t < Cin and Cin % t == 0:
            ct_cands.append(t)
    # Cout tiles: largest divisor <= 256 that is 8-aligned (or Cout itself).
    co_cands = [t for t in range(min(Cout, 256), 0, -1)
                if Cout % t == 0 and (t % 8 == 0 or t == Cout)]
    if not co_cands:
        co_cands = [Cout]
    for ct in ct_cands:
        for co_t in co_cands:
            if _vmem_bytes(co_t, ct, F, L, HW, out_isz) <= budget:
                return co_t, ct
    # TODO(synk): nothing fits -> needs spatial (row-band) tiling; fall back to smallest.
    return co_cands[-1], ct_cands[-1]


# ---------------------------------------------------------------------------
# Rotation-matrix construction (elementwise trig glue, mirrors PyTorch exactly)
# ---------------------------------------------------------------------------
def _get_rotation_matrix(thetas):
    bs, g = thetas.shape
    t = thetas.reshape(-1)
    x = jnp.cos(t)
    y = jnp.sin(t)
    a = x - y
    b = x * y
    c = x + y
    z = jnp.zeros_like(x)
    one = jnp.ones_like(x)
    rows_pos = [
        [a, 1 - a, z, z, z, z, z, z, z],
        [z, x - b, b, z, 1 - c + b, y - b, z, z, z],
        [z, z, a, z, z, 1 - a, z, z, z],
        [b, y - b, z, x - b, 1 - c + b, z, z, z, z],
        [z, z, z, z, one, z, z, z, z],
        [z, z, z, z, 1 - c + b, x - b, z, y - b, b],
        [z, z, z, 1 - a, z, z, a, z, z],
        [z, z, z, y - b, 1 - c + b, z, b, x - b, z],
        [z, z, z, z, z, z, z, 1 - a, a],
    ]
    rows_neg = [
        [c, z, z, 1 - c, z, z, z, z, z],
        [-b, x + b, z, b - y, 1 - a - b, z, z, z, z],
        [z, 1 - c, c, z, z, z, z, z, z],
        [z, z, z, x + b, 1 - a - b, z, -b, b - y, z],
        [z, z, z, z, one, z, z, z, z],
        [z, b - y, -b, z, 1 - a - b, x + b, z, z, z],
        [z, z, z, z, z, z, c, 1 - c, z],
        [z, z, z, z, 1 - a - b, b - y, z, x + b, -b],
        [z, z, z, z, z, 1 - c, z, z, c],
    ]
    pos = jnp.stack([jnp.stack(r, 0) for r in rows_pos], 0)   # [9, 9, bs*g]
    neg = jnp.stack([jnp.stack(r, 0) for r in rows_neg], 0)   # [9, 9, bs*g]
    mask = (t >= 0).astype(pos.dtype)[None, None, :]
    rot = mask * pos + (1.0 - mask) * neg
    rot = jnp.transpose(rot, (2, 0, 1)).reshape(bs, g, 9, 9)
    return rot


# ---------------------------------------------------------------------------
# rotate_func: batch_rotate_multiweight.  Tiny GEMM as an f32 einsum producing the
# (bs, Cout, Cin*9) channel-major/tap-minor layout the conv kernel consumes directly.
# ---------------------------------------------------------------------------
def rotate_weights(weights, lambdas, thetas):
    # weights: [n, Cout, Cin, 3, 3]; lambdas, thetas: [bs, n]
    bs, n = thetas.shape
    _, Cout, Cin, _, _ = weights.shape
    rot = _get_rotation_matrix(thetas) * lambdas[:, :, None, None]   # [bs, n, 9, 9]
    rot = jnp.transpose(rot, (0, 2, 1, 3)).reshape(bs, 9, n * 9)     # [bs, 9, n*9]
    w_flat = jnp.transpose(weights, (0, 3, 4, 1, 2)).reshape(n * 9, Cout, Cin)
    # rw[b, co, ci, tap] == PyTorch rotated weight [b*Cout+co, ci, ky, kx], tap = ky*3+kx
    rw = jnp.einsum('btj,joc->boct', rot, w_flat)                    # [bs, Cout, Cin, 9] f32
    return rw.reshape(bs, Cout, Cin * 9)


# ---------------------------------------------------------------------------
# Grouped conv (groups == batch after the PyTorch reshape trick) via the Pallas kernel
# ---------------------------------------------------------------------------
def adaptive_rotated_conv2d(x, rw_flat, *, stride=1, padding=1):
    # x: [bs, Cin, H, W]; rw_flat: [bs, Cout, Cin*9] (f32, from rotate_weights)
    assert stride == 1 and padding == 1          # module defaults
    bs, Cin, H, W = x.shape
    Cout = rw_flat.shape[1]
    Hp, Wp = H + 2, W + 2
    L = H * Wp                                   # accumulator width (flat-shift trick)
    F = Hp * Wp + 2                              # +2 so the (ky=2, kx=2) tap stays in-bounds
    HW = H * W
    out_dtype = x.dtype
    out_isz = jnp.dtype(out_dtype).itemsize

    # bf16 MXU operands; zero-pad + flatten spatial onto the lane axis (no HBM im2col).
    xp = jnp.pad(x.astype(jnp.bfloat16), ((0, 0), (0, 0), (1, 1), (1, 1)))
    xf = jnp.pad(xp.reshape(bs, Cin, Hp * Wp), ((0, 0), (0, 0), (0, 2)))   # (bs, Cin, F)
    wmat = rw_flat.astype(jnp.bfloat16)                                     # (bs, Cout, Cin*9)

    budget, vmem_limit = _vmem_budget()
    co_t, ct = _choose_tiles(Cout, Cin, F, L, HW, out_isz, budget)
    # Megacore balance on 2-TC parts: avoid a degenerate parallel extent when bs == 1.
    if bs == 1 and co_t == Cout and Cout % 16 == 0:
        co_t = Cout // 2
    n_co, n_ci = Cout // co_t, Cin // ct

    x_reads = 1 if n_ci == 1 else n_co           # x block index is co-invariant when n_ci == 1
    cost = pl.CostEstimate(
        flops=2 * bs * Cout * 9 * Cin * L,
        transcendentals=0,
        bytes_accessed=int(bs * Cin * F * 2 * x_reads
                           + bs * Cout * Cin * 9 * 2
                           + bs * Cout * HW * out_isz))

    out = pl.pallas_call(
        functools.partial(_arc_conv_kernel, H=H, W=W, Wp=Wp),
        out_shape=jax.ShapeDtypeStruct((bs, Cout, HW), out_dtype),
        grid=(bs, n_co, n_ci),
        in_specs=[
            pl.BlockSpec((1, co_t, ct * 9), lambda b, co, ci: (b, co, ci)),
            pl.BlockSpec((1, ct, F), lambda b, co, ci: (b, ci, 0)),
        ],
        out_specs=pl.BlockSpec((1, co_t, HW), lambda b, co, ci: (b, co, 0)),
        scratch_shapes=[pltpu.VMEM((co_t, L), jnp.float32)],
        compiler_params=pltpu.CompilerParams(
            dimension_semantics=("parallel", "parallel", "arbitrary"),
            vmem_limit_bytes=vmem_limit),
        cost_estimate=cost,
    )(wmat, xf)
    return out.reshape(bs, Cout, H, W)


# ---------------------------------------------------------------------------
# Routing function + full forward
# ---------------------------------------------------------------------------
# TODO(synk): the original module takes rounting_func as an external nn.Module
# (default None); a deterministic synthetic routing head is synthesized here.
def routing_func(x, w_alpha, w_theta):
    pooled = jnp.mean(x, axis=(2, 3))                  # [bs, Cin]
    alphas = jax.nn.sigmoid(pooled @ w_alpha)          # [bs, n]
    angles = math.pi * jnp.tanh(pooled @ w_theta)      # [bs, n] in (-pi, pi)
    return alphas, angles


def forward(x, weight, w_alpha, w_theta):
    alphas, angles = routing_func(x, w_alpha, w_theta)
    rw = rotate_weights(weight, alphas, angles)        # [bs, Cout, Cin*9] f32
    return adaptive_rotated_conv2d(x, rw)


# ---------------------------------------------------------------------------
if __name__ == "__main__":
    bs, Cin, H, W = 2, 4, 16, 16
    Cout, n, k = 8, 4, 3

    key = jax.random.PRNGKey(0)
    k1, k2, k3, k4 = jax.random.split(key, 4)

    # kaiming_normal_(mode='fan_out', relu) on a [n, Cout, Cin, k, k] param:
    # fan_out = n * Cin * k * k  ->  std = sqrt(2 / fan_out)
    fan_out = n * Cin * k * k
    std = math.sqrt(2.0 / fan_out)
    weight = std * jax.random.normal(k1, (n, Cout, Cin, k, k), jnp.float32)
    w_alpha = 0.1 * jax.random.normal(k2, (Cin, n), jnp.float32)
    w_theta = 0.1 * jax.random.normal(k3, (Cin, n), jnp.float32)
    x = jax.random.normal(k4, (bs, Cin, H, W), jnp.float32)

    out = jax.jit(forward)(x, weight, w_alpha, w_theta)
    out = jax.block_until_ready(out)
    assert out.shape == (bs, Cout, H, W), out.shape

    # Reference: plain-JAX per-batch conv with the same bf16-rounded operands
    # (the kernel uses bf16 MXU operands with f32 accumulation).
    alphas, angles = routing_func(x, w_alpha, w_theta)
    rw = rotate_weights(weight, alphas, angles)                    # [bs, Cout, Cin*9]
    rw_oihw = rw.reshape(bs, Cout, Cin, 3, 3)                      # [b, co, ci, ky, kx]
    rw_bf = rw_oihw.astype(jnp.bfloat16).astype(jnp.float32)
    x_bf = x.astype(jnp.bfloat16).astype(jnp.float32)
    ref = jnp.concatenate([
        lax.conv_general_dilated(
            x_bf[b:b + 1], rw_bf[b], window_strides=(1, 1),
            padding=((1, 1), (1, 1)),
            dimension_numbers=("NCHW", "OIHW", "NCHW"))
        for b in range(bs)], axis=0)
    err = float(jnp.max(jnp.abs(out - ref)))
    assert err < 2e-2, err

    print("KERNEL_OK")
</pallas_src>

<mosaic_0001>
module attributes {stable_mosaic.version = 11 : i64} {
  func.func @_arc_conv_kernel(%arg0: i32, %arg1: i32, %arg2: i32, %arg3: memref<1x8x36xbf16, #tpu.memory_space<vmem>>, %arg4: memref<1x4x326xbf16, #tpu.memory_space<vmem>>, %arg5: memref<1x8x256xf32, #tpu.memory_space<vmem>>, %arg6: memref<8x288xf32, #tpu.memory_space<vmem>>) attributes {dimension_semantics = [#tpu.dimension_semantics<parallel>, #tpu.dimension_semantics<parallel>, #tpu.dimension_semantics<arbitrary>], iteration_bounds = array<i64: 2, 1, 1>, scalar_prefetch = 0 : i64, scratch_operands = 1 : i64, tpu.core_type = #tpu.core_type<tc>, window_params = [{transform_indices = @transform_0, window_bounds = array<i64: 1, 8, 36>}, {transform_indices = @transform_1, window_bounds = array<i64: 1, 4, 326>}, {transform_indices = @transform_2, window_bounds = array<i64: 1, 8, 256>}]} {
    %c0 = arith.constant 0 : index
    %c0_0 = arith.constant 0 : index
    %c0_1 = arith.constant 0 : index
    %0 = vector.load %arg4[%c0, %c0_0, %c0_1] : memref<1x4x326xbf16, #tpu.memory_space<vmem>>, vector<1x4x326xbf16>
    %1 = vector.shape_cast %0 : vector<1x4x326xbf16> to vector<4x326xbf16>
    %2 = vector.extract_strided_slice %1 {offsets = [0, 0], sizes = [4, 288], strides = [1, 1]} : vector<4x326xbf16> to vector<4x288xbf16>
    %3 = vector.extract_strided_slice %1 {offsets = [0, 1], sizes = [4, 288], strides = [1, 1]} : vector<4x326xbf16> to vector<4x288xbf16>
    %4 = vector.extract_strided_slice %1 {offsets = [0, 2], sizes = [4, 288], strides = [1, 1]} : vector<4x326xbf16> to vector<4x288xbf16>
    %5 = vector.extract_strided_slice %1 {offsets = [0, 18], sizes = [4, 288], strides = [1, 1]} : vector<4x326xbf16> to vector<4x288xbf16>
    %6 = vector.extract_strided_slice %1 {offsets = [0, 19], sizes = [4, 288], strides = [1, 1]} : vector<4x326xbf16> to vector<4x288xbf16>
    %7 = vector.extract_strided_slice %1 {offsets = [0, 20], sizes = [4, 288], strides = [1, 1]} : vector<4x326xbf16> to vector<4x288xbf16>
    %8 = vector.extract_strided_slice %1 {offsets = [0, 36], sizes = [4, 288], strides = [1, 1]} : vector<4x326xbf16> to vector<4x288xbf16>
    %9 = vector.extract_strided_slice %1 {offsets = [0, 37], sizes = [4, 288], strides = [1, 1]} : vector<4x326xbf16> to vector<4x288xbf16>
    %10 = vector.extract_strided_slice %1 {offsets = [0, 38], sizes = [4, 288], strides = [1, 1]} : vector<4x326xbf16> to vector<4x288xbf16>
    %11 = vector.shape_cast %2 : vector<4x288xbf16> to vector<4x1x288xbf16>
    %12 = vector.shape_cast %3 : vector<4x288xbf16> to vector<4x1x288xbf16>
    %13 = vector.shape_cast %4 : vector<4x288xbf16> to vector<4x1x288xbf16>
    %14 = vector.shape_cast %5 : vector<4x288xbf16> to vector<4x1x288xbf16>
    %15 = vector.shape_cast %6 : vector<4x288xbf16> to vector<4x1x288xbf16>
    %16 = vector.shape_cast %7 : vector<4x288xbf16> to vector<4x1x288xbf16>
    %17 = vector.shape_cast %8 : vector<4x288xbf16> to vector<4x1x288xbf16>
    %18 = vector.shape_cast %9 : vector<4x288xbf16> to vector<4x1x288xbf16>
    %19 = vector.shape_cast %10 : vector<4x288xbf16> to vector<4x1x288xbf16>
    %20 = tpu.concatenate %11, %12, %13, %14, %15, %16, %17, %18, %19 in 1 : vector<4x1x288xbf16>, vector<4x1x288xbf16>, vector<4x1x288xbf16>, vector<4x1x288xbf16>, vector<4x1x288xbf16>, vector<4x1x288xbf16>, vector<4x1x288xbf16>, vector<4x1x288xbf16>, vector<4x1x288xbf16> -> vector<4x9x288xbf16>
    %21 = vector.shape_cast %20 : vector<4x9x288xbf16> to vector<36x288xbf16>
    %c0_2 = arith.constant 0 : index
    %c0_3 = arith.constant 0 : index
    %c0_4 = arith.constant 0 : index
    %22 = vector.load %arg3[%c0_2, %c0_3, %c0_4] : memref<1x8x36xbf16, #tpu.memory_space<vmem>>, vector<1x8x36xbf16>
    %23 = vector.shape_cast %22 : vector<1x8x36xbf16> to vector<8x36xbf16>
    %cst = arith.constant dense<0.000000e+00> : vector<8x288xf32>
    %24 = tpu.matmul %23, %21, %cst {dimension_numbers = #tpu.dot_dimension_numbers<[1], [0], [0], [1], [0, 0, 1, 1], [], []>} : vector<8x36xbf16>, vector<36x288xbf16>, vector<8x288xf32> -> vector<8x288xf32>
    %c0_i32 = arith.constant 0 : i32
    %25 = arith.cmpi eq, %arg2, %c0_i32 : i32
    %26 = arith.extui %25 : i1 to i32
    %c0_i32_5 = arith.constant 0 : i32
    %27 = arith.cmpi ne, %26, %c0_i32_5 : i32
    scf.if %27 {
      %c0_10 = arith.constant 0 : index
      %c0_11 = arith.constant 0 : index
      %34 = vector.load %arg6[%c0_10, %c0_11] : memref<8x288xf32, #tpu.memory_space<vmem>>, vector<8x288xf32>
      tpu.vector_store %arg6[%c0_10, %c0_11], %24 {strides = array<i32>} : memref<8x288xf32, #tpu.memory_space<vmem>>, vector<8x288xf32>,
    } else {
    }
    %c0_i32_6 = arith.constant 0 : i32
    %28 = arith.cmpi sgt, %arg2, %c0_i32_6 : i32
    %29 = arith.extui %28 : i1 to i32
    %c0_i32_7 = arith.constant 0 : i32
    %30 = arith.cmpi ne, %29, %c0_i32_7 : i32
    scf.if %30 {
      %c0_10 = arith.constant 0 : index
      %c0_11 = arith.constant 0 : index
      %34 = vector.load %arg6[%c0_10, %c0_11] : memref<8x288xf32, #tpu.memory_space<vmem>>, vector<8x288xf32>
      %35 = arith.addf %34, %24 : vector<8x288xf32>
      %c0_12 = arith.constant 0 : index
      %c0_13 = arith.constant 0 : index
      %36 = vector.load %arg6[%c0_12, %c0_13] : memref<8x288xf32, #tpu.memory_space<vmem>>, vector<8x288xf32>
      tpu.vector_store %arg6[%c0_12, %c0_13], %35 {strides = array<i32>} : memref<8x288xf32, #tpu.memory_space<vmem>>, vector<8x288xf32>,
    } else {
    }
    %c0_i32_8 = arith.constant 0 : i32
    %31 = arith.cmpi eq, %arg2, %c0_i32_8 : i32
    %32 = arith.extui %31 : i1 to i32
    %c0_i32_9 = arith.constant 0 : i32
    %33 = arith.cmpi ne, %32, %c0_i32_9 : i32
    scf.if %33 {
      %c0_10 = arith.constant 0 : index
      %c0_11 = arith.constant 0 : index
      %34 = vector.load %arg6[%c0_10, %c0_11] : memref<8x288xf32, #tpu.memory_space<vmem>>, vector<8x288xf32>
      %35 = vector.shape_cast %34 : vector<8x288xf32> to vector<8x16x18xf32>
      %36 = vector.extract_strided_slice %35 {offsets = [0, 0, 0], sizes = [8, 16, 16], strides = [1, 1, 1]} : vector<8x16x18xf32> to vector<8x16x16xf32>
      %37 = vector.shape_cast %36 : vector<8x16x16xf32> to vector<8x256xf32>
      %c0_12 = arith.constant 0 : index
      %c0_13 = arith.constant 0 : index
      %c0_14 = arith.constant 0 : index
      %38 = vector.load %arg5[%c0_12, %c0_13, %c0_14] : memref<1x8x256xf32, #tpu.memory_space<vmem>>, vector<1x8x256xf32>
      %39 = vector.shape_cast %38 : vector<1x8x256xf32> to vector<8x256xf32>
      %40 = vector.shape_cast %37 : vector<8x256xf32> to vector<1x8x256xf32>
      tpu.vector_store %arg5[%c0_12, %c0_13, %c0_14], %40 {strides = array<i32>} : memref<1x8x256xf32, #tpu.memory_space<vmem>>, vector<1x8x256xf32>,
    } else {
    }
    return
  }
  func.func @transform_0(%arg0: i32, %arg1: i32, %arg2: i32) -> (i32, i32, i32) {
    %c0_i32 = arith.constant 0 : i32
    return %arg0, %arg1, %arg2 : i32, i32, i32
  }
  func.func @transform_1(%arg0: i32, %arg1: i32, %arg2: i32) -> (i32, i32, i32) {
    %c0_i32 = arith.constant 0 : i32
    %c0_i32_0 = arith.constant 0 : i32
    return %arg0, %arg2, %c0_i32 : i32, i32, i32
  }
  func.func @transform_2(%arg0: i32, %arg1: i32, %arg2: i32) -> (i32, i32, i32) {
    %c0_i32 = arith.constant 0 : i32
    %c0_i32_0 = arith.constant 0 : i32
    return %arg0, %arg1, %c0_i32 : i32, i32, i32
  }
}

</mosaic_0001>

<llo_original>
// kernel: forward.1
$region0: #{forward.1}
  #allocation0 [shape = 'u32[]', space=smem, size = 0x4, offset = 0x4, fixed_abs, tag = 'smem constant byte address 0x4 - core index']
  #allocation1 [shape = 'u32[72,128]{1,0:T(1,128)}', space=vmem, size = 0x9000, scoped, tag = 'internal scratch']
  #allocation2 [shape = 'f32[8,288]{1,0:T(8,128)}', space=vmem, size = 0x3000, scoped, tag = 'scratch operand']
  %s0 = inlined_call_operand.vmem [shape: bf16[2,8,36], index: 0, kind: input, shape index: {}]
  %s1 = inlined_call_operand.vmem [shape: bf16[2,4,326], index: 1, kind: input, shape index: {}]
  %s2 = inlined_call_operand.vmem [shape: f32[2,8,256], index: 2, kind: output, shape index: {}]
  %s3 = sld [smem:[#allocation0]]
  $region53: #{forward.1} parent=0
    _
  %s5 = ssub.s32 1, %s3
  %s6 = scalar_select 0, %s5, %s3
  loop: start=0, step=1, limit=4
  $region2: #{forward.1} parent=0 // loop_pre_header
    _
  $region3: #{forward.1} parent=0 // loop_header
    %s8 = sphi 0, %s12
    %p9 = scmp.ge.s32.totalorder %s8, 4
    %s15 = sphi 0, %s34
    %s16 = sphi 0, %s30
    %s17 = sphi 0, %s26
    %s18 = sphi 0, %s15
    %s19 = sphi 0, %s16
    %s20 = sphi 0, %s17
    %s21 = sphi 0, %s18
    %s22 = sphi 0, %s19
    %s23 = sphi 0, %s20
    %s41 = sphi 0, %s43
    %s44 = sphi 0, %s41
    %s45 = sphi 0, %s44
    %s61 = sphi 0, %s45
    %s69 = sphi 0, %s71
    %s72 = sphi 0, %s69
    %s73 = sphi 0, %s72
    %s89 = sphi 0, %s73
    %s97 = sphi 0, %s99
    %s100 = sphi 0, %s97
    %s101 = sphi 0, %s100
    %s117 = sphi 0, %s101
  $region4: #{forward.1} parent=0 // loop_header_branch
    %11 = sbr.rel (%p9) target = $region8
  $region5: #{forward.1} parent=0 // loop_body
    %s13 = ssub.s32 %s8, 1
    %s14 = ssub.s32 %s8, 2
    %s24 = sadd.s32 1, %s17
    %p25 = scmp.ge.s32.totalorder %s24, 1
    %s26 = scalar_select %p25, 0, %s24
    %s27 = sadd.s32 1, %s16
    %s28 = scalar_select %p25, %s27, %s16
    %p29 = scmp.ge.s32.totalorder %s28, 1
    %s30 = scalar_select %p29, 0, %s28
    %s31 = sadd.s32 1, %s15
    %s32 = scalar_select %p29, %s31, %s15
    %p33 = scmp.ge.s32.totalorder %s32, 2
    %s34 = scalar_select %p33, 0, %s32
    %s35 = ssub.s32 %s15, %s34
    %s36 = ssub.s32 %s16, %s30
    %s37 = sor.u32 %s35, %s36
    %s38 = ssub.s32 %s17, %s26
    %s39 = sor.u32 %s37, %s38
    %p40 = scmp.eq.s32.totalorder %s39, 0
    %s42 = sadd.s32 %s41, 1
    %s43 = scalar_select %p40, %s41, %s42
    %p46 = pneg %p40
    %p47 = scmp.eq.s32.totalorder %s8, 1
    %p48 = por %p46, %p47
    %p49 = scmp.ne.s32.totalorder %s41, %s44
    %p50 = scmp.eq.s32.totalorder %s8, 0
    %p51 = por %p49, %p50
    %p52 = scmp.ne.s32.totalorder %s41, %s44
    %p53 = scmp.eq.s32.totalorder %s13, 1
    %p54 = por %p52, %p53
    %p55 = scmp.ne.s32.totalorder %s44, %s45
    %p56 = scmp.eq.s32.totalorder %s13, 0
    %p57 = por %p55, %p56
    %p58 = scmp.ne.s32.totalorder %s44, %s45
    %p59 = scmp.eq.s32.totalorder %s14, 1
    %p60 = por %p58, %p59
    %p62 = scmp.ne.s32.totalorder %s45, %s61
    %p63 = scmp.eq.s32.totalorder %s14, 0
    %p64 = por %p62, %p63
    %s65 = ssub.s32 %s15, %s34
    %s66 = ssub.s32 %s17, %s26
    %s67 = sor.u32 %s65, %s66
    %p68 = scmp.eq.s32.totalorder %s67, 0
    %s70 = sadd.s32 %s69, 1
    %s71 = scalar_select %p68, %s69, %s70
    %p74 = pneg %p68
    %p75 = scmp.eq.s32.totalorder %s8, 1
    %p76 = por %p74, %p75
    %p77 = scmp.ne.s32.totalorder %s69, %s72
    %p78 = scmp.eq.s32.totalorder %s8, 0
    %p79 = por %p77, %p78
    %p80 = scmp.ne.s32.totalorder %s69, %s72
    %p81 = scmp.eq.s32.totalorder %s13, 1
    %p82 = por %p80, %p81
    %p83 = scmp.ne.s32.totalorder %s72, %s73
    %p84 = scmp.eq.s32.totalorder %s13, 0
    %p85 = por %p83, %p84
    %p86 = scmp.ne.s32.totalorder %s72, %s73
    %p87 = scmp.eq.s32.totalorder %s14, 1
    %p88 = por %p86, %p87
    %p90 = scmp.ne.s32.totalorder %s73, %s89
    %p91 = scmp.eq.s32.totalorder %s14, 0
    %p92 = por %p90, %p91
    %s93 = ssub.s32 %s15, %s34
    %s94 = ssub.s32 %s16, %s30
    %s95 = sor.u32 %s93, %s94
    %p96 = scmp.eq.s32.totalorder %s95, 0
    %s98 = sadd.s32 %s97, 1
    %s99 = scalar_select %p96, %s97, %s98
    %p102 = pneg %p96
    %p103 = scmp.eq.s32.totalorder %s8, 1
    %p104 = por %p102, %p103
    %p105 = scmp.ne.s32.totalorder %s97, %s100
    %p106 = scmp.eq.s32.totalorder %s8, 0
    %p107 = por %p105, %p106
    %p108 = scmp.ne.s32.totalorder %s97, %s100
    %p109 = scmp.eq.s32.totalorder %s13, 1
    %p110 = por %p108, %p109
    %p111 = scmp.ne.s32.totalorder %s100, %s101
    %p112 = scmp.eq.s32.totalorder %s13, 0
    %p113 = por %p111, %p112
    %p114 = scmp.ne.s32.totalorder %s100, %s101
    %p115 = scmp.eq.s32.totalorder %s14, 1
    %p116 = por %p114, %p115
    %p118 = scmp.ne.s32.totalorder %s101, %s117
    %p119 = scmp.eq.s32.totalorder %s14, 0
    %p120 = por %p118, %p119
    %p121 = scmp.le.s32.totalorder 1, %s8
    %p122 = scmp.lt.s32.totalorder %s8, 3
    %p123 = pnand %p121, %p122
    %p124 = pneg %p123
    // Predicated region
    $region9: #{forward.1} parent=5 // pred_check
      _
    $region10: #{forward.1} parent=5 // pred_check_branch
      %126 = sbr.rel (%p123) target = $region12
    $region11: #{forward.1} parent=5 // pred_region
      %s127 = ssub.s32 %s8, 1
    $region12: #{forward.1} parent=5 // pred_fallthru
      _
    %p128 = scmp.lt.s32.totalorder %s8, 2
    // Predicated region
    $region13: #{forward.1} parent=5 // pred_check
      %p129 = pneg %p128
    $region14: #{forward.1} parent=5 // pred_check_branch
      %131 = sbr.rel (%p129) target = $region16
    $region15: #{forward.1} parent=5 // pred_region
      // Predicated region
      $region17: #{forward.1} parent=15 // pred_check
        %p132 = pneg %p51
      $region18: #{forward.1} parent=15 // pred_check_branch
        %134 = sbr.rel (%p132) target = $region20
      $region19: #{forward.1} parent=15 // pred_region
        %p135 = scmp.lt.s32.totalorder %s15, 1
        %s136 = scalar_select %p135, %s15, 1
        %p137 = scmp.lt.s32.totalorder %s16, 0
        %s138 = scalar_select %p137, %s16, 0
        %p139 = scmp.lt.s32.totalorder %s17, 0
        %s140 = scalar_select %p139, %s17, 0
        %s141 = sadd.s32 %s140, %s138
        %s142 = sadd.s32 %s141, %s136
        %s143 = smul.addr %s142, 4
        %s144 = scalar_lea.vmem %s0, %s143
      $region20: #{forward.1} parent=15 // pred_fallthru
        _
      // Predicated region
      $region21: #{forward.1} parent=15 // pred_check
        %p145 = pneg %p79
      $region22: #{forward.1} parent=15 // pred_check_branch
        %147 = sbr.rel (%p145) target = $region24
      $region23: #{forward.1} parent=15 // pred_region
        %p148 = scmp.lt.s32.totalorder %s15, 1
        %s149 = scalar_select %p148, %s15, 1
        %p150 = scmp.lt.s32.totalorder %s17, 0
        %s151 = scalar_select %p150, %s17, 0
        %s152 = smul.addr %s151, 3
        %s153 = smul.addr %s149, 3
        %s154 = sadd.s32 %s152, %s153
        %s155 = smul.addr %s154, 2
        %s156 = scalar_lea.vmem %s1, %s155
      $region24: #{forward.1} parent=15 // pred_fallthru
        _
    $region16: #{forward.1} parent=5 // pred_fallthru
      _
    %p157 = scmp.le.s32.totalorder 1, %s8
    %p158 = scmp.lt.s32.totalorder %s8, 3
    %p159 = pnand %p157, %p158
    %p160 = pneg %p159
    // Predicated region
    $region25: #{forward.1} parent=5 // pred_check
      _
    $region26: #{forward.1} parent=5 // pred_check_branch
      %162 = sbr.rel (%p159) target = $region28
    $region27: #{forward.1} parent=5 // pred_region
      %s163 = ssub.s32 %s8, 1
      %p164 = scmp.lt.s32.totalorder %s18, 1
      %s165 = scalar_select %p164, %s18, 1
      %p166 = scmp.lt.s32.totalorder %s19, 0
      %s167 = scalar_select %p166, %s19, 0
      %p168 = scmp.lt.s32.totalorder %s20, 0
      %s169 = scalar_select %p168, %s20, 0
      %s170 = sadd.s32 %s169, %s167
      %s171 = sadd.s32 %s170, %s165
      %s172 = smul.addr %s171, 4
      %s173 = scalar_lea.vmem %s0, %s172
      %p174 = pneg %p57
      %p175 = pneg %p54
      %p176 = scmp.lt.s32.totalorder %s18, 1
      %s177 = scalar_select %p176, %s18, 1
      %p178 = scmp.lt.s32.totalorder %s20, 0
      %s179 = scalar_select %p178, %s20, 0
      %s180 = smul.addr %s179, 3
      %s181 = smul.addr %s177, 3
      %s182 = sadd.s32 %s180, %s181
      %s183 = smul.addr %s182, 2
      %s184 = scalar_lea.vmem %s1, %s183
      %p185 = pneg %p85
      %p186 = pneg %p82
      %p187 = pneg %p113
      %p188 = pneg %p110
      %p189 = scmp.lt.s32.totalorder %s18, 1
      %s190 = scalar_select %p189, %s18, 1
      %p191 = scmp.lt.s32.totalorder %s19, 0
      %s192 = scalar_select %p191, %s19, 0
      %s193 = smul.addr %s192, 2
      %s194 = smul.addr %s190, 2
      %s195 = sadd.s32 %s193, %s194
      %s196 = smul.addr %s195, 8
      %s197 = scalar_lea.vmem %s2, %s196
      %p198 = scmp.lt.s32.totalorder %s18, 1
      %s199 = scalar_select %p198, %s18, 1
      %p200 = scmp.lt.s32.totalorder %s19, 0
      %s201 = scalar_select %p200, %s19, 0
      %p202 = scmp.lt.s32.totalorder %s20, 0
      %s203 = scalar_select %p202, %s20, 0
      %s204 = sadd.s32 %s203, %s201
      %s205 = sadd.s32 %s204, %s199
      %s206 = smul.addr %s205, 4
      %s207 = scalar_lea.vmem %s0, %s206
      %p208 = scmp.lt.s32.totalorder %s18, 1
      %s209 = scalar_select %p208, %s18, 1
      %p210 = scmp.lt.s32.totalorder %s20, 0
      %s211 = scalar_select %p210, %s20, 0
      %s212 = smul.addr %s211, 3
      %s213 = smul.addr %s209, 3
      %s214 = sadd.s32 %s212, %s213
      %s215 = smul.addr %s214, 2
      %s216 = scalar_lea.vmem %s1, %s215
      %p217 = scmp.lt.s32.totalorder %s18, 1
      %s218 = scalar_select %p217, %s18, 1
      %p219 = scmp.lt.s32.totalorder %s19, 0
      %s220 = scalar_select %p219, %s19, 0
      %s221 = smul.addr %s220, 2
      %s222 = smul.addr %s218, 2
      %s223 = sadd.s32 %s221, %s222
      %s224 = smul.addr %s223, 8
      %s225 = scalar_lea.vmem %s2, %s224
      %v227 = vld [vmem:[%s216] sm:$0x3f]
      %v229 = vrot.slane %v227, 1
      %v230 = vrot.slane %v227, 2
      %v231 = vrot.slane %v227, 3
      %vm232 = vcmask 1040384
      %v235 = vsel %vm232, %v227, %v229
      %vm236 = vcmask 1042434
      %v239 = vsel %vm236, %v230, %v231
      %vm240 = vcmask 1041408
      %v241 = vsel %vm240, %v235, %v239
      %vm243 = vcmask 1041409
      %v244 = vsel %vm243, %v227, %v229
      %vm245 = vcmask 1043459
      %v246 = vsel %vm245, %v230, %v231
      %vm247 = vcmask 1042433
      %v248 = vsel %vm247, %v244, %v246
      %v250 = vrot.slane %v248, 1
      %v251 = vunpack.i.l.s16 %v241
      %v252 = vunpack.i.h.s16 %v241
      %v253 = vunpack.i.l.s16 %v250
      %v254 = vunpack.i.h.s16 %v250
      %v255 = vpack.i.b16 %v251, %v251
      %v256 = vpack.i.b16 %v252, %v252
      %v257 = vpack.i.b16 %v253, %v253
      %v258 = vpack.i.b16 %v254, %v254
      %v259 = vperm.slane %v255, 0
      %v260 = vperm.slane %v255, 1
      %v261 = vperm.slane %v255, 2
      %v262 = vperm.slane %v256, 0
      %v263 = vperm.slane %v256, 1
      %v264 = vperm.slane %v256, 2
      %v265 = vperm.slane %v257, 0
      %v266 = vperm.slane %v257, 1
      %v267 = vperm.slane %v257, 2
      %v268 = vperm.slane %v258, 0
      %v269 = vperm.slane %v258, 1
      %v270 = vperm.slane %v258, 2
      %283 = vrot.lane.b32.xlu0 %v259, 127
      %v284 = vpop.permute.xlu0 %283
      %285 = vrot.lane.b32.xlu0 %v260, 127
      %v286 = vpop.permute.xlu0 %285
      %287 = vrot.lane.b32.xlu0 %v261, 127
      %v288 = vpop.permute.xlu0 %287
      %289 = vrot.lane.b32.xlu0 %v262, 127
      %v290 = vpop.permute.xlu0 %289
      %291 = vrot.lane.b32.xlu0 %v263, 127
      %v292 = vpop.permute.xlu0 %291
      %293 = vrot.lane.b32.xlu0 %v264, 127
      %v294 = vpop.permute.xlu0 %293
      %295 = vrot.lane.b32.xlu0 %v265, 127
      %v296 = vpop.permute.xlu0 %295
      %297 = vrot.lane.b32.xlu0 %v266, 127
      %v298 = vpop.permute.xlu0 %297
      %299 = vrot.lane.b32.xlu0 %v267, 127
      %v300 = vpop.permute.xlu0 %299
      %301 = vrot.lane.b32.xlu0 %v268, 127
      %v302 = vpop.permute.xlu0 %301
      %303 = vrot.lane.b32.xlu0 %v269, 127
      %v304 = vpop.permute.xlu0 %303
      %305 = vrot.lane.b32.xlu0 %v270, 127
      %v306 = vpop.permute.xlu0 %305
      %vm307 = vcmask 1039360
      %v308 = vsel %vm307, %v284, %v286
      %v309 = vsel %vm307, %v286, %v288
      %v310 = vsel %vm307, %v290, %v292
      %v311 = vsel %vm307, %v292, %v294
      %v312 = vsel %vm307, %v296, %v298
      %v313 = vsel %vm307, %v298, %v300
      %v314 = vsel %vm307, %v302, %v304
      %v315 = vsel %vm307, %v304, %v306
      %328 = vrot.lane.b32.xlu0 %v259, 126
      %v329 = vpop.permute.xlu0 %328
      %330 = vrot.lane.b32.xlu0 %v260, 126
      %v331 = vpop.permute.xlu0 %330
      %332 = vrot.lane.b32.xlu0 %v261, 126
      %v333 = vpop.permute.xlu0 %332
      %334 = vrot.lane.b32.xlu0 %v262, 126
      %v335 = vpop.permute.xlu0 %334
      %336 = vrot.lane.b32.xlu0 %v263, 126
      %v337 = vpop.permute.xlu0 %336
      %338 = vrot.lane.b32.xlu0 %v264, 126
      %v339 = vpop.permute.xlu0 %338
      %340 = vrot.lane.b32.xlu0 %v265, 126
      %v341 = vpop.permute.xlu0 %340
      %342 = vrot.lane.b32.xlu0 %v266, 126
      %v343 = vpop.permute.xlu0 %342
      %344 = vrot.lane.b32.xlu0 %v267, 126
      %v345 = vpop.permute.xlu0 %344
      %346 = vrot.lane.b32.xlu0 %v268, 126
      %v347 = vpop.permute.xlu0 %346
      %348 = vrot.lane.b32.xlu0 %v269, 126
      %v349 = vpop.permute.xlu0 %348
      %350 = vrot.lane.b32.xlu0 %v270, 126
      %v351 = vpop.permute.xlu0 %350
      %vm352 = vcmask 1031168
      %v353 = vsel %vm352, %v329, %v331
      %v354 = vsel %vm352, %v331, %v333
      %v355 = vsel %vm352, %v335, %v337
      %v356 = vsel %vm352, %v337, %v339
      %v357 = vsel %vm352, %v341, %v343
      %v358 = vsel %vm352, %v343, %v345
      %v359 = vsel %vm352, %v347, %v349
      %v360 = vsel %vm352, %v349, %v351
      %361 = vrot.lane.b32.xlu0 %v259, 110
      %v362 = vpop.permute.xlu0 %361
      %363 = vrot.lane.b32.xlu0 %v260, 110
      %v364 = vpop.permute.xlu0 %363
      %365 = vrot.lane.b32.xlu0 %v261, 110
      %v366 = vpop.permute.xlu0 %365
      %367 = vrot.lane.b32.xlu0 %v262, 110
      %v368 = vpop.permute.xlu0 %367
      %369 = vrot.lane.b32.xlu0 %v263, 110
      %v370 = vpop.permute.xlu0 %369
      %371 = vrot.lane.b32.xlu0 %v264, 110
      %v372 = vpop.permute.xlu0 %371
      %373 = vrot.lane.b32.xlu0 %v265, 110
      %v374 = vpop.permute.xlu0 %373
      %375 = vrot.lane.b32.xlu0 %v266, 110
      %v376 = vpop.permute.xlu0 %375
      %377 = vrot.lane.b32.xlu0 %v267, 110
      %v378 = vpop.permute.xlu0 %377
      %379 = vrot.lane.b32.xlu0 %v268, 110
      %v380 = vpop.permute.xlu0 %379
      %381 = vrot.lane.b32.xlu0 %v269, 110
      %v382 = vpop.permute.xlu0 %381
      %383 = vrot.lane.b32.xlu0 %v270, 110
      %v384 = vpop.permute.xlu0 %383
      %vm385 = vcmask 900096
      %v386 = vsel %vm385, %v362, %v364
      %v387 = vsel %vm385, %v364, %v366
      %v388 = vsel %vm385, %v368, %v370
      %v389 = vsel %vm385, %v370, %v372
      %v390 = vsel %vm385, %v374, %v376
      %v391 = vsel %vm385, %v376, %v378
      %v392 = vsel %vm385, %v380, %v382
      %v393 = vsel %vm385, %v382, %v384
      %406 = vrot.lane.b32.xlu0 %v259, 109
      %v407 = vpop.permute.xlu0 %406
      %408 = vrot.lane.b32.xlu0 %v260, 109
      %v409 = vpop.permute.xlu0 %408
      %410 = vrot.lane.b32.xlu0 %v261, 109
      %v411 = vpop.permute.xlu0 %410
      %412 = vrot.lane.b32.xlu0 %v262, 109
      %v413 = vpop.permute.xlu0 %412
      %414 = vrot.lane.b32.xlu0 %v263, 109
      %v415 = vpop.permute.xlu0 %414
      %416 = vrot.lane.b32.xlu0 %v264, 109
      %v417 = vpop.permute.xlu0 %416
      %418 = vrot.lane.b32.xlu0 %v265, 109
      %v419 = vpop.permute.xlu0 %418
      %420 = vrot.lane.b32.xlu0 %v266, 109
      %v421 = vpop.permute.xlu0 %420
      %422 = vrot.lane.b32.xlu0 %v267, 109
      %v423 = vpop.permute.xlu0 %422
      %424 = vrot.lane.b32.xlu0 %v268, 109
      %v425 = vpop.permute.xlu0 %424
      %426 = vrot.lane.b32.xlu0 %v269, 109
      %v427 = vpop.permute.xlu0 %426
      %428 = vrot.lane.b32.xlu0 %v270, 109
      %v429 = vpop.permute.xlu0 %428
      %vm430 = vcmask 891904
      %v431 = vsel %vm430, %v407, %v409
      %v432 = vsel %vm430, %v409, %v411
      %v433 = vsel %vm430, %v413, %v415
      %v434 = vsel %vm430, %v415, %v417
      %v435 = vsel %vm430, %v419, %v421
      %v436 = vsel %vm430, %v421, %v423
      %v437 = vsel %vm430, %v425, %v427
      %v438 = vsel %vm430, %v427, %v429
      %439 = vrot.lane.b32.xlu0 %v259, 108
      %v440 = vpop.permute.xlu0 %439
      %441 = vrot.lane.b32.xlu0 %v260, 108
      %v442 = vpop.permute.xlu0 %441
      %443 = vrot.lane.b32.xlu0 %v261, 108
      %v444 = vpop.permute.xlu0 %443
      %445 = vrot.lane.b32.xlu0 %v262, 108
      %v446 = vpop.permute.xlu0 %445
      %447 = vrot.lane.b32.xlu0 %v263, 108
      %v448 = vpop.permute.xlu0 %447
      %449 = vrot.lane.b32.xlu0 %v264, 108
      %v450 = vpop.permute.xlu0 %449
      %451 = vrot.lane.b32.xlu0 %v265, 108
      %v452 = vpop.permute.xlu0 %451
      %453 = vrot.lane.b32.xlu0 %v266, 108
      %v454 = vpop.permute.xlu0 %453
      %455 = vrot.lane.b32.xlu0 %v267, 108
      %v456 = vpop.permute.xlu0 %455
      %457 = vrot.lane.b32.xlu0 %v268, 108
      %v458 = vpop.permute.xlu0 %457
      %459 = vrot.lane.b32.xlu0 %v269, 108
      %v460 = vpop.permute.xlu0 %459
      %461 = vrot.lane.b32.xlu0 %v270, 108
      %v462 = vpop.permute.xlu0 %461
      %vm463 = vcmask 883712
      %v464 = vsel %vm463, %v440, %v442
      %v465 = vsel %vm463, %v442, %v444
      %v466 = vsel %vm463, %v446, %v448
      %v467 = vsel %vm463, %v448, %v450
      %v468 = vsel %vm463, %v452, %v454
      %v469 = vsel %vm463, %v454, %v456
      %v470 = vsel %vm463, %v458, %v460
      %v471 = vsel %vm463, %v460, %v462
      %484 = vrot.lane.b32.xlu0 %v259, 92
      %v485 = vpop.permute.xlu0 %484
      %486 = vrot.lane.b32.xlu0 %v260, 92
      %v487 = vpop.permute.xlu0 %486
      %488 = vrot.lane.b32.xlu0 %v261, 92
      %v489 = vpop.permute.xlu0 %488
      %490 = vrot.lane.b32.xlu0 %v262, 92
      %v491 = vpop.permute.xlu0 %490
      %492 = vrot.lane.b32.xlu0 %v263, 92
      %v493 = vpop.permute.xlu0 %492
      %494 = vrot.lane.b32.xlu0 %v264, 92
      %v495 = vpop.permute.xlu0 %494
      %496 = vrot.lane.b32.xlu0 %v265, 92
      %v497 = vpop.permute.xlu0 %496
      %498 = vrot.lane.b32.xlu0 %v266, 92
      %v499 = vpop.permute.xlu0 %498
      %500 = vrot.lane.b32.xlu0 %v267, 92
      %v501 = vpop.permute.xlu0 %500
      %502 = vrot.lane.b32.xlu0 %v268, 92
      %v503 = vpop.permute.xlu0 %502
      %504 = vrot.lane.b32.xlu0 %v269, 92
      %v505 = vpop.permute.xlu0 %504
      %506 = vrot.lane.b32.xlu0 %v270, 92
      %v507 = vpop.permute.xlu0 %506
      %vm508 = vcmask 752640
      %v509 = vsel %vm508, %v485, %v487
      %v510 = vsel %vm508, %v487, %v489
      %v511 = vsel %vm508, %v491, %v493
      %v512 = vsel %vm508, %v493, %v495
      %v513 = vsel %vm508, %v497, %v499
      %v514 = vsel %vm508, %v499, %v501
      %v515 = vsel %vm508, %v503, %v505
      %v516 = vsel %vm508, %v505, %v507
      %517 = vrot.lane.b32.xlu0 %v259, 91
      %v518 = vpop.permute.xlu0 %517
      %519 = vrot.lane.b32.xlu0 %v260, 91
      %v520 = vpop.permute.xlu0 %519
      %521 = vrot.lane.b32.xlu0 %v261, 91
      %v522 = vpop.permute.xlu0 %521
      %523 = vrot.lane.b32.xlu0 %v262, 91
      %v524 = vpop.permute.xlu0 %523
      %525 = vrot.lane.b32.xlu0 %v263, 91
      %v526 = vpop.permute.xlu0 %525
      %527 = vrot.lane.b32.xlu0 %v264, 91
      %v528 = vpop.permute.xlu0 %527
      %529 = vrot.lane.b32.xlu0 %v265, 91
      %v530 = vpop.permute.xlu0 %529
      %531 = vrot.lane.b32.xlu0 %v266, 91
      %v532 = vpop.permute.xlu0 %531
      %533 = vrot.lane.b32.xlu0 %v267, 91
      %v534 = vpop.permute.xlu0 %533
      %535 = vrot.lane.b32.xlu0 %v268, 91
      %v536 = vpop.permute.xlu0 %535
      %537 = vrot.lane.b32.xlu0 %v269, 91
      %v538 = vpop.permute.xlu0 %537
      %539 = vrot.lane.b32.xlu0 %v270, 91
      %v540 = vpop.permute.xlu0 %539
      %vm541 = vcmask 744448
      %v542 = vsel %vm541, %v518, %v520
      %v543 = vsel %vm541, %v520, %v522
      %v544 = vsel %vm541, %v524, %v526
      %v545 = vsel %vm541, %v526, %v528
      %v546 = vsel %vm541, %v530, %v532
      %v547 = vsel %vm541, %v532, %v534
      %v548 = vsel %vm541, %v536, %v538
      %v549 = vsel %vm541, %v538, %v540
      %562 = vrot.lane.b32.xlu0 %v259, 90
      %v563 = vpop.permute.xlu0 %562
      %564 = vrot.lane.b32.xlu0 %v260, 90
      %v565 = vpop.permute.xlu0 %564
      %566 = vrot.lane.b32.xlu0 %v261, 90
      %v567 = vpop.permute.xlu0 %566
      %568 = vrot.lane.b32.xlu0 %v262, 90
      %v569 = vpop.permute.xlu0 %568
      %570 = vrot.lane.b32.xlu0 %v263, 90
      %v571 = vpop.permute.xlu0 %570
      %572 = vrot.lane.b32.xlu0 %v264, 90
      %v573 = vpop.permute.xlu0 %572
      %574 = vrot.lane.b32.xlu0 %v265, 90
      %v575 = vpop.permute.xlu0 %574
      %576 = vrot.lane.b32.xlu0 %v266, 90
      %v577 = vpop.permute.xlu0 %576
      %578 = vrot.lane.b32.xlu0 %v267, 90
      %v579 = vpop.permute.xlu0 %578
      %580 = vrot.lane.b32.xlu0 %v268, 90
      %v581 = vpop.permute.xlu0 %580
      %582 = vrot.lane.b32.xlu0 %v269, 90
      %v583 = vpop.permute.xlu0 %582
      %584 = vrot.lane.b32.xlu0 %v270, 90
      %v585 = vpop.permute.xlu0 %584
      %vm586 = vcmask 736256
      %v587 = vsel %vm586, %v563, %v565
      %v588 = vsel %vm586, %v565, %v567
      %v589 = vsel %vm586, %v569, %v571
      %v590 = vsel %vm586, %v571, %v573
      %v591 = vsel %vm586, %v575, %v577
      %v592 = vsel %vm586, %v577, %v579
      %v593 = vsel %vm586, %v581, %v583
      %v594 = vsel %vm586, %v583, %v585
      %vm595 = vcmask 1040384
      %vm596 = vsmask.f32 256
      %vm597 = vmand %vm595, %vm596
      %v598 = vsel %vm597, %v259, %v308
      %v599 = vsel %vm597, %v260, %v309
      %v600 = vsel %vm597, %v261, %v288
      %v601 = vsel %vm597, %v262, %v310
      %v602 = vsel %vm597, %v263, %v311
      %v603 = vsel %vm597, %v264, %v294
      %v604 = vsel %vm597, %v265, %v312
      %v605 = vsel %vm597, %v266, %v313
      %v606 = vsel %vm597, %v267, %v300
      %v607 = vsel %vm597, %v268, %v314
      %v608 = vsel %vm597, %v269, %v315
      %v609 = vsel %vm597, %v270, %v306
      %v612 = vsel %vm232, %v598, %v353
      %v616 = vsel %vm232, %v599, %v354
      %v620 = vsel %vm232, %v600, %v333
      %v624 = vsel %vm232, %v601, %v355
      %v628 = vsel %vm232, %v602, %v356
      %v632 = vsel %vm232, %v603, %v339
      %v636 = vsel %vm232, %v604, %v357
      %v640 = vsel %vm232, %v605, %v358
      %v644 = vsel %vm232, %v606, %v345
      %v648 = vsel %vm232, %v607, %v359
      %v652 = vsel %vm232, %v608, %v360
      %v656 = vsel %vm232, %v609, %v351
      %vm658 = vcmask 1041408
      %vm659 = vsmask.f32 1280
      %vm660 = vmand %vm658, %vm659
      %v661 = vsel %vm660, %v612, %v386
      %v662 = vsel %vm660, %v616, %v387
      %v663 = vsel %vm660, %v620, %v366
      %v664 = vsel %vm660, %v624, %v388
      %v665 = vsel %vm660, %v628, %v389
      %v666 = vsel %vm660, %v632, %v372
      %v667 = vsel %vm660, %v636, %v390
      %v668 = vsel %vm660, %v640, %v391
      %v669 = vsel %vm660, %v644, %v378
      %v670 = vsel %vm660, %v648, %v392
      %v671 = vsel %vm660, %v652, %v393
      %v672 = vsel %vm660, %v656, %v384
      %v675 = vsel %vm240, %v661, %v431
      %v679 = vsel %vm240, %v662, %v432
      %v683 = vsel %vm240, %v663, %v411
      %v687 = vsel %vm240, %v664, %v433
      %v691 = vsel %vm240, %v665, %v434
      %v695 = vsel %vm240, %v666, %v417
      %v699 = vsel %vm240, %v667, %v435
      %v703 = vsel %vm240, %v668, %v436
      %v707 = vsel %vm240, %v669, %v423
      %v711 = vsel %vm240, %v670, %v437
      %v715 = vsel %vm240, %v671, %v438
      %v719 = vsel %vm240, %v672, %v429
      %vm721 = vcmask 1042432
      %vm722 = vsmask.f32 2304
      %vm723 = vmand %vm721, %vm722
      %v724 = vsel %vm723, %v675, %v464
      %v725 = vsel %vm723, %v679, %v465
      %v726 = vsel %vm723, %v683, %v444
      %v727 = vsel %vm723, %v687, %v466
      %v728 = vsel %vm723, %v691, %v467
      %v729 = vsel %vm723, %v695, %v450
      %v730 = vsel %vm723, %v699, %v468
      %v731 = vsel %vm723, %v703, %v469
      %v732 = vsel %vm723, %v707, %v456
      %v733 = vsel %vm723, %v711, %v470
      %v734 = vsel %vm723, %v715, %v471
      %v735 = vsel %vm723, %v719, %v462
      %vm736 = vcmask 1042432
      %v739 = vsel %vm736, %v724, %v509
      %v743 = vsel %vm736, %v725, %v510
      %v747 = vsel %vm736, %v726, %v489
      %v751 = vsel %vm736, %v727, %v511
      %v755 = vsel %vm736, %v728, %v512
      %v759 = vsel %vm736, %v729, %v495
      %v763 = vsel %vm736, %v730, %v513
      %v767 = vsel %vm736, %v731, %v514
      %v771 = vsel %vm736, %v732, %v501
      %v775 = vsel %vm736, %v733, %v515
      %v779 = vsel %vm736, %v734, %v516
      %v783 = vsel %vm736, %v735, %v507
      %vm785 = vcmask 1043456
      %vm786 = vsmask.f32 3328
      %vm787 = vmand %vm785, %vm786
      %v788 = vsel %vm787, %v739, %v542
      %v789 = vsel %vm787, %v743, %v543
      %v790 = vsel %vm787, %v747, %v522
      %v791 = vsel %vm787, %v751, %v544
      %v792 = vsel %vm787, %v755, %v545
      %v793 = vsel %vm787, %v759, %v528
      %v794 = vsel %vm787, %v763, %v546
      %v795 = vsel %vm787, %v767, %v547
      %v796 = vsel %vm787, %v771, %v534
      %v797 = vsel %vm787, %v775, %v548
      %v798 = vsel %vm787, %v779, %v549
      %v799 = vsel %vm787, %v783, %v540
      %vm800 = vcmask 1043456
      %v803 = vsel %vm800, %v788, %v587
      %v806 = vsel %vm800, %v789, %v588
      %v809 = vsel %vm800, %v790, %v567
      %v812 = vsel %vm800, %v791, %v589
      %v815 = vsel %vm800, %v792, %v590
      %v818 = vsel %vm800, %v793, %v573
      %v821 = vsel %vm800, %v794, %v591
      %v824 = vsel %vm800, %v795, %v592
      %v827 = vsel %vm800, %v796, %v579
      %v830 = vsel %vm800, %v797, %v593
      %v833 = vsel %vm800, %v798, %v594
      %v836 = vsel %vm800, %v799, %v585
      %v845 = vrot.slane %v806, 7
      %v846 = vrot.slane %v809, 6
      %v847 = vrot.slane %v815, 7
      %v848 = vrot.slane %v818, 6
      %v849 = vrot.slane %v824, 7
      %v850 = vrot.slane %v827, 6
      %v851 = vrot.slane %v833, 7
      %v852 = vrot.slane %v836, 6
      %v854 = vsel %vm232, %v803, %v845
      %v856 = vsel %vm240, %v854, %v846
      %v858 = vsel %vm243, %v803, %v845
      %v859 = vsel %vm247, %v858, %v846
      %v861 = vrot.slane %v859, 1
      %v862 = vsel %vm236, %v803, %v845
      %vm863 = vcmask 1043458
      %v864 = vsel %vm863, %v862, %v846
      %v866 = vrot.slane %v864, 2
      %v867 = vsel %vm245, %v803, %v845
      %vm868 = vcmask 1044483
      %v869 = vsel %vm868, %v867, %v846
      %v871 = vrot.slane %v869, 3
      %vm872 = vcmask 1044484
      %v873 = vsel %vm872, %v803, %v845
      %vm874 = vcmask 1045508
      %v875 = vsel %vm874, %v873, %v846
      %v877 = vrot.slane %v875, 4
      %v879 = vsel %vm232, %v812, %v847
      %v881 = vsel %vm240, %v879, %v848
      %v883 = vsel %vm243, %v812, %v847
      %v884 = vsel %vm247, %v883, %v848
      %v886 = vrot.slane %v884, 1
      %v887 = vsel %vm236, %v812, %v847
      %v888 = vsel %vm863, %v887, %v848
      %v890 = vrot.slane %v888, 2
      %v891 = vsel %vm245, %v812, %v847
      %v892 = vsel %vm868, %v891, %v848
      %v894 = vrot.slane %v892, 3
      %v895 = vsel %vm872, %v812, %v847
      %v896 = vsel %vm874, %v895, %v848
      %v898 = vrot.slane %v896, 4
      %v900 = vsel %vm232, %v821, %v849
      %v902 = vsel %vm240, %v900, %v850
      %v904 = vsel %vm243, %v821, %v849
      %v905 = vsel %vm247, %v904, %v850
      %v907 = vrot.slane %v905, 1
      %v908 = vsel %vm236, %v821, %v849
      %v909 = vsel %vm863, %v908, %v850
      %v911 = vrot.slane %v909, 2
      %v912 = vsel %vm245, %v821, %v849
      %v913 = vsel %vm868, %v912, %v850
      %v915 = vrot.slane %v913, 3
      %v916 = vsel %vm872, %v821, %v849
      %v917 = vsel %vm874, %v916, %v850
      %v919 = vrot.slane %v917, 4
      %v921 = vsel %vm232, %v830, %v851
      %v923 = vsel %vm240, %v921, %v852
      %v925 = vsel %vm243, %v830, %v851
      %v926 = vsel %vm247, %v925, %v852
      %v928 = vrot.slane %v926, 1
      %v929 = vsel %vm236, %v830, %v851
      %v930 = vsel %vm863, %v929, %v852
      %v932 = vrot.slane %v930, 2
      %v933 = vsel %vm245, %v830, %v851
      %v934 = vsel %vm868, %v933, %v852
      %v936 = vrot.slane %v934, 3
      %v937 = vsel %vm872, %v830, %v851
      %v938 = vsel %vm874, %v937, %v852
      %v940 = vrot.slane %v938, 4
      %v941 = vunpack.i.l.s16 %v856
      %v942 = vunpack.i.h.s16 %v856
      %v943 = vunpack.i.l.s16 %v861
      %v944 = vunpack.i.h.s16 %v861
      %v945 = vunpack.i.l.s16 %v866
      %v946 = vunpack.i.h.s16 %v866
      %v947 = vunpack.i.l.s16 %v871
      %v948 = vunpack.i.h.s16 %v871
      %v949 = vunpack.i.l.s16 %v877
      %v950 = vunpack.i.l.s16 %v881
      %v951 = vunpack.i.h.s16 %v881
      %v952 = vunpack.i.l.s16 %v886
      %v953 = vunpack.i.h.s16 %v886
      %v954 = vunpack.i.l.s16 %v890
      %v955 = vunpack.i.h.s16 %v890
      %v956 = vunpack.i.l.s16 %v894
      %v957 = vunpack.i.h.s16 %v894
      %v958 = vunpack.i.l.s16 %v898
      %v959 = vunpack.i.l.s16 %v902
      %v960 = vunpack.i.h.s16 %v902
      %v961 = vunpack.i.l.s16 %v907
      %v962 = vunpack.i.h.s16 %v907
      %v963 = vunpack.i.l.s16 %v911
      %v964 = vunpack.i.h.s16 %v911
      %v965 = vunpack.i.l.s16 %v915
      %v966 = vunpack.i.h.s16 %v915
      %v967 = vunpack.i.l.s16 %v919
      %v968 = vunpack.i.l.s16 %v923
      %v969 = vunpack.i.h.s16 %v923
      %v970 = vunpack.i.l.s16 %v928
      %v971 = vunpack.i.h.s16 %v928
      %v972 = vunpack.i.l.s16 %v932
      %v973 = vunpack.i.h.s16 %v932
      %v974 = vunpack.i.l.s16 %v936
      %v975 = vunpack.i.h.s16 %v936
      %v976 = vunpack.i.l.s16 %v940
      %v977 = vld [vmem:[%s207] sm:$0xf]
      %v978 = vpack.i.b16 %v942, %v941
      %v979 = vpack.i.b16 %v944, %v943
      %v980 = vpack.i.b16 %v946, %v945
      %v981 = vpack.i.b16 %v948, %v947
      %v982 = vpack.i.b16 %v950, %v949
      %v983 = vpack.i.b16 %v952, %v951
      %v984 = vpack.i.b16 %v954, %v953
      %v985 = vpack.i.b16 %v956, %v955
      %v986 = vpack.i.b16 %v958, %v957
      %v987 = vpack.i.b16 %v960, %v959
      %v988 = vpack.i.b16 %v962, %v961
      %v989 = vpack.i.b16 %v964, %v963
      %v990 = vpack.i.b16 %v966, %v965
      %v991 = vpack.i.b16 %v968, %v967
      %v992 = vpack.i.b16 %v970, %v969
      %v993 = vpack.i.b16 %v972, %v971
      %v994 = vpack.i.b16 %v974, %v973
      %v995 = vpack.i.b16 %v976, %v975
      %997 = vst [vmem:[#allocation1] ss:$9 sm:$0xff] %v978
      %s999 = scalar_lea.vmem [#allocation1], 1
      %1000 = vst [vmem:[%s999] ss:$9 sm:$0xff] %v979
      %s1002 = scalar_lea.vmem [#allocation1], 2
      %1003 = vst [vmem:[%s1002] ss:$9 sm:$0xff] %v980
      %s1005 = scalar_lea.vmem [#allocation1], 3
      %1006 = vst [vmem:[%s1005] ss:$9 sm:$0xff] %v981
      %s1008 = scalar_lea.vmem [#allocation1], 4
      %1009 = vst [vmem:[%s1008] ss:$9 sm:$0xff] %v982
      %s1011 = scalar_lea.vmem [#allocation1], 5
      %1012 = vst [vmem:[%s1011] ss:$9 sm:$0xff] %v983
      %s1014 = scalar_lea.vmem [#allocation1], 6
      %1015 = vst [vmem:[%s1014] ss:$9 sm:$0xff] %v984
      %s1017 = scalar_lea.vmem [#allocation1], 7
      %1018 = vst [vmem:[%s1017] ss:$9 sm:$0xff] %v985
      %v1019 = vld [vmem:[#allocation1] sm:$0xff]
      %v1020 = vld [vmem:[#allocation1 + $0x9] sm:$0xff]
      %v1021 = vld [vmem:[#allocation1 + $0x12] sm:$0xff]
      %1023 = vst [vmem:[#allocation1] ss:$9 sm:$0xff] %v986
      %1025 = vst [vmem:[%s999] ss:$9 sm:$0xff] %v987
      %1027 = vst [vmem:[%s1002] ss:$9 sm:$0xff] %v988
      %1029 = vst [vmem:[%s1005] ss:$9 sm:$0xff] %v989
      %1031 = vst [vmem:[%s1008] ss:$9 sm:$0xff] %v990
      %1033 = vst [vmem:[%s1011] ss:$9 sm:$0xff] %v991
      %1035 = vst [vmem:[%s1014] ss:$9 sm:$0xff] %v992
      %1037 = vst [vmem:[%s1017] ss:$9 sm:$0xff] %v993
      %v1038 = vld [vmem:[#allocation1] sm:$0xff]
      %v1039 = vld [vmem:[#allocation1 + $0x9] sm:$0xff]
      %v1040 = vld [vmem:[#allocation1 + $0x12] sm:$0xff]
      %1042 = vst [vmem:[#allocation1] ss:$9 sm:$0xff] %v994
      %1044 = vst [vmem:[%s999] ss:$9 sm:$0xff] %v995
      %v1045 = vld [vmem:[#allocation1] sm:$0xff]
      %v1046 = vld [vmem:[#allocation1 + $0x9] sm:$0xff]
      %v1047 = vld [vmem:[#allocation1 + $0x12] sm:$0xff]
      %vm1054 = vcmask 293888
      %v1056 = vsel %vm1054, %v977, 0
      %v1058 = vsel %vm240, %v1045, 0
      %v1060 = vsel %vm240, %v1046, 0
      %v1062 = vsel %vm240, %v1047, 0
      %1064 = vmatpush.bf16.msra.mxu0 0
      %1065 = vmatpush.bf16.msra.mxu0 0
      %1066 = vmatpush.bf16.msra.mxu0 0
      %1067 = vmatpush.bf16.msra.mxu0 0
      %1068 = vmatpush.bf16.msra.mxu0 0
      %1069 = vmatpush.bf16.msra.mxu0 %v1058
      %1070 = vmatpush.bf16.msra.mxu0 %v1038
      %1071 = vmatpush.bf16.msra.mxu0 %v1019
      %1072 = vmatmul.bf16.gmra.mxu0 %v1056
      %v1073 = vpop.f32.mrf.mxu0
      %v1074 = vadd.f32 0.0, %v1073
      %v1075 = vpop.f32.mrf.mxu0
      %1076 = vdwg.mxu0
      %1077 = vmatpush.bf16.msra.mxu0 0
      %1078 = vmatpush.bf16.msra.mxu0 0
      %1079 = vmatpush.bf16.msra.mxu0 0
      %1080 = vmatpush.bf16.msra.mxu0 0
      %1081 = vmatpush.bf16.msra.mxu0 0
      %1082 = vmatpush.bf16.msra.mxu0 %v1060
      %1083 = vmatpush.bf16.msra.mxu0 %v1039
      %1084 = vmatpush.bf16.msra.mxu0 %v1020
      %1085 = vmatmul.bf16.gmra.mxu0 %v1056
      %v1086 = vpop.f32.mrf.mxu0
      %v1087 = vadd.f32 0.0, %v1086
      %v1088 = vpop.f32.mrf.mxu0
      %1089 = vdwg.mxu0
      %1090 = vmatpush.bf16.msra.mxu0 0
      %1091 = vmatpush.bf16.msra.mxu0 0
      %1092 = vmatpush.bf16.msra.mxu0 0
      %1093 = vmatpush.bf16.msra.mxu0 0
      %1094 = vmatpush.bf16.msra.mxu0 0
      %1095 = vmatpush.bf16.msra.mxu0 %v1062
      %1096 = vmatpush.bf16.msra.mxu0 %v1040
      %1097 = vmatpush.bf16.msra.mxu0 %v1021
      %1098 = vmatmul.bf16.gmra.mxu0 %v1056
      %v1099 = vpop.f32.mrf.mxu0
      %v1100 = vadd.f32 0.0, %v1099
      %v1101 = vpop.f32.mrf.mxu0
      %1102 = vdwg.mxu0
      %p1103 = scmp.eq.s32.totalorder %s20, 0
      // Predicated region
      $region29: #{forward.1} parent=27 // pred_check
        %p1104 = pneg %p1103
      $region30: #{forward.1} parent=27 // pred_check_branch
        %1106 = sbr.rel (%p1104) target = $region32
      $region31: #{forward.1} parent=27 // pred_region
        %1107 = vst [vmem:[#allocation2] sm:$0xff] %v1074
        %1108 = vst [vmem:[#allocation2 + $0x8] sm:$0xff] %v1087
        %vm1109 = vcmask 261120
        %1110 = vst.msk [vmem:[#allocation2 + $0x10] sm:$0xff] %vm1109, %v1100
      $region32: #{forward.1} parent=27 // pred_fallthru
        _
      %p1111 = scmp.gt.s32.totalorder %s20, 0
      // Predicated region
      $region33: #{forward.1} parent=27 // pred_check
        %p1112 = pneg %p1111
      $region34: #{forward.1} parent=27 // pred_check_branch
        %1114 = sbr.rel (%p1112) target = $region36
      $region35: #{forward.1} parent=27 // pred_region
        %v1115 = vld [vmem:[#allocation2] sm:$0xff]
        %v1116 = vld [vmem:[#allocation2 + $0x8] sm:$0xff]
        %v1117 = vld [vmem:[#allocation2 + $0x10] sm:$0xff]
        %v1118 = vadd.f32 %v1115, %v1074
        %v1119 = vadd.f32 %v1116, %v1087
        %v1120 = vadd.f32 %v1117, %v1100
        %1121 = vst [vmem:[#allocation2] sm:$0xff] %v1118
        %1122 = vst [vmem:[#allocation2 + $0x8] sm:$0xff] %v1119
        %vm1123 = vcmask 261120
        %1124 = vst.msk [vmem:[#allocation2 + $0x10] sm:$0xff] %vm1123, %v1120
      $region36: #{forward.1} parent=27 // pred_fallthru
        _
      // Predicated region
      $region37: #{forward.1} parent=27 // pred_check
        %p1125 = pneg %p1103
      $region38: #{forward.1} parent=27 // pred_check_branch
        %1127 = sbr.rel (%p1125) target = $region40
      $region39: #{forward.1} parent=27 // pred_region
        %v1128 = vld [vmem:[#allocation2] sm:$0xff]
        %v1129 = vld [vmem:[#allocation2 + $0x8] sm:$0xff]
        %v1130 = vld [vmem:[#allocation2 + $0x10] sm:$0xff]
        %1132 = vrot.lane.b32.xlu0 %v1128, 110
        %v1133 = vpop.permute.xlu0 %1132
        %1135 = vrot.lane.b32.xlu0 %v1128, 92
        %v1136 = vpop.permute.xlu0 %1135
        %1138 = vrot.lane.b32.xlu0 %v1128, 74
        %v1139 = vpop.permute.xlu0 %1138
        %1141 = vrot.lane.b32.xlu0 %v1128, 56
        %v1142 = vpop.permute.xlu0 %1141
        %1144 = vrot.lane.b32.xlu0 %v1128, 38
        %v1145 = vpop.permute.xlu0 %1144
        %1147 = vrot.lane.b32.xlu0 %v1128, 20
        %v1148 = vpop.permute.xlu0 %1147
        %1151 = vrot.lane.b32.xlu0 %v1128, 2
        %v1152 = vpop.permute.xlu0 %1151
        %1153 = vrot.lane.b32.xlu0 %v1129, 2
        %v1154 = vpop.permute.xlu0 %1153
        %vm1155 = vcmask 15360
        %v1156 = vsel %vm1155, %v1152, %v1154
        %1158 = vrot.lane.b32.xlu0 %v1129, 112
        %v1159 = vpop.permute.xlu0 %1158
        %1161 = vrot.lane.b32.xlu0 %v1129, 94
        %v1162 = vpop.permute.xlu0 %1161
        %1164 = vrot.lane.b32.xlu0 %v1129, 76
        %v1165 = vpop.permute.xlu0 %1164
        %1167 = vrot.lane.b32.xlu0 %v1129, 58
        %v1168 = vpop.permute.xlu0 %1167
        %1170 = vrot.lane.b32.xlu0 %v1129, 40
        %v1171 = vpop.permute.xlu0 %1170
        %1173 = vrot.lane.b32.xlu0 %v1129, 22
        %v1174 = vpop.permute.xlu0 %1173
        %1177 = vrot.lane.b32.xlu0 %v1129, 4
        %v1178 = vpop.permute.xlu0 %1177
        %1179 = vrot.lane.b32.xlu0 %v1130, 4
        %v1180 = vpop.permute.xlu0 %1179
        %vm1181 = vcmask 31744
        %v1182 = vsel %vm1181, %v1178, %v1180
        %1184 = vrot.lane.b32.xlu0 %v1130, 114
        %v1185 = vpop.permute.xlu0 %1184
        %v1187 = vrot.slane %v1136, 4
        %vm1188 = vcmask 1047556
        %v1189 = vsel %vm1188, %v1187, %v1128
        %v1190 = vrot.slane %v1128, 4
        %v1191 = vsel %vm1188, %v1136, %v1190
        %v1193 = vunpack.c.l.s4 1983009808
        %v1194 = vunpack.c.0.s8 %v1193
        %v1195 = vperm.slane %v1189, %v1194
        %v1197 = vunpack.c.l.s4 1983009808
        %v1198 = vunpack.c.0.s8 %v1197
        %v1199 = vperm.slane %v1191, %v1198
        %v1200 = vrot.slane %v1139, 4
        %v1201 = vsel %vm1188, %v1200, %v1133
        %v1202 = vrot.slane %v1133, 4
        %v1203 = vsel %vm1188, %v1139, %v1202
        %v1205 = vunpack.c.l.s4 1983009808
        %v1206 = vunpack.c.0.s8 %v1205
        %v1207 = vperm.slane %v1201, %v1206
        %v1209 = vunpack.c.l.s4 1983009808
        %v1210 = vunpack.c.0.s8 %v1209
        %v1211 = vperm.slane %v1203, %v1210
        %v1212 = vrot.slane %v1148, 4
        %v1213 = vsel %vm1188, %v1212, %v1142
        %v1214 = vrot.slane %v1142, 4
        %v1215 = vsel %vm1188, %v1148, %v1214
        %v1217 = vunpack.c.l.s4 1983009808
        %v1218 = vunpack.c.0.s8 %v1217
        %v1219 = vperm.slane %v1213, %v1218
        %v1221 = vunpack.c.l.s4 1983009808
        %v1222 = vunpack.c.0.s8 %v1221
        %v1223 = vperm.slane %v1215, %v1222
        %v1224 = vrot.slane %v1156, 4
        %v1225 = vsel %vm1188, %v1224, %v1145
        %v1226 = vrot.slane %v1145, 4
        %v1227 = vsel %vm1188, %v1156, %v1226
        %v1229 = vunpack.c.l.s4 1983009808
        %v1230 = vunpack.c.0.s8 %v1229
        %v1231 = vperm.slane %v1225, %v1230
        %v1233 = vunpack.c.l.s4 1983009808
        %v1234 = vunpack.c.0.s8 %v1233
        %v1235 = vperm.slane %v1227, %v1234
        %v1236 = vrot.slane %v1207, 4
        %v1237 = vsel %vm1188, %v1236, %v1195
        %v1238 = vrot.slane %v1195, 4
        %v1239 = vsel %vm1188, %v1207, %v1238
        %v1241 = vunpack.c.l.s4 1934713408
        %v1242 = vunpack.c.0.s8 %v1241
        %v1243 = vperm.slane %v1237, %v1242
        %v1245 = vunpack.c.l.s4 1934713408
        %v1246 = vunpack.c.0.s8 %v1245
        %v1247 = vperm.slane %v1239, %v1246
        %v1248 = vrot.slane %v1211, 4
        %v1249 = vsel %vm1188, %v1248, %v1199
        %v1250 = vrot.slane %v1199, 4
        %v1251 = vsel %vm1188, %v1211, %v1250
        %v1253 = vunpack.c.l.s4 1934713408
        %v1254 = vunpack.c.0.s8 %v1253
        %v1255 = vperm.slane %v1249, %v1254
        %v1257 = vunpack.c.l.s4 1934713408
        %v1258 = vunpack.c.0.s8 %v1257
        %v1259 = vperm.slane %v1251, %v1258
        %v1260 = vrot.slane %v1231, 4
        %v1261 = vsel %vm1188, %v1260, %v1219
        %v1262 = vrot.slane %v1219, 4
        %v1263 = vsel %vm1188, %v1231, %v1262
        %v1265 = vunpack.c.l.s4 1934713408
        %v1266 = vunpack.c.0.s8 %v1265
        %v1267 = vperm.slane %v1261, %v1266
        %v1269 = vunpack.c.l.s4 1934713408
        %v1270 = vunpack.c.0.s8 %v1269
        %v1271 = vperm.slane %v1263, %v1270
        %v1272 = vrot.slane %v1235, 4
        %v1273 = vsel %vm1188, %v1272, %v1223
        %v1274 = vrot.slane %v1223, 4
        %v1275 = vsel %vm1188, %v1235, %v1274
        %v1277 = vunpack.c.l.s4 1934713408
        %v1278 = vunpack.c.0.s8 %v1277
        %v1279 = vperm.slane %v1273, %v1278
        %v1281 = vunpack.c.l.s4 1934713408
        %v1282 = vunpack.c.0.s8 %v1281
        %v1283 = vperm.slane %v1275, %v1282
        %v1284 = vrot.slane %v1267, 4
        %v1285 = vsel %vm1188, %v1284, %v1243
        %v1286 = vrot.slane %v1243, 4
        %v1287 = vsel %vm1188, %v1267, %v1286
        %v1288 = vrot.slane %v1271, 4
        %v1289 = vsel %vm1188, %v1288, %v1247
        %v1290 = vrot.slane %v1247, 4
        %v1291 = vsel %vm1188, %v1271, %v1290
        %v1292 = vrot.slane %v1279, 4
        %v1293 = vsel %vm1188, %v1292, %v1255
        %v1294 = vrot.slane %v1255, 4
        %v1295 = vsel %vm1188, %v1279, %v1294
        %v1296 = vrot.slane %v1283, 4
        %v1297 = vsel %vm1188, %v1296, %v1259
        %v1298 = vrot.slane %v1259, 4
        %v1299 = vsel %vm1188, %v1283, %v1298
        %v1300 = vrot.slane %v1165, 4
        %v1301 = vsel %vm1188, %v1300, %v1159
        %v1302 = vrot.slane %v1159, 4
        %v1303 = vsel %vm1188, %v1165, %v1302
        %v1305 = vunpack.c.l.s4 1983009808
        %v1306 = vunpack.c.0.s8 %v1305
        %v1307 = vperm.slane %v1301, %v1306
        %v1309 = vunpack.c.l.s4 1983009808
        %v1310 = vunpack.c.0.s8 %v1309
        %v1311 = vperm.slane %v1303, %v1310
        %v1312 = vrot.slane %v1168, 4
        %v1313 = vsel %vm1188, %v1312, %v1162
        %v1314 = vrot.slane %v1162, 4
        %v1315 = vsel %vm1188, %v1168, %v1314
        %v1317 = vunpack.c.l.s4 1983009808
        %v1318 = vunpack.c.0.s8 %v1317
        %v1319 = vperm.slane %v1313, %v1318
        %v1321 = vunpack.c.l.s4 1983009808
        %v1322 = vunpack.c.0.s8 %v1321
        %v1323 = vperm.slane %v1315, %v1322
        %v1324 = vrot.slane %v1182, 4
        %v1325 = vsel %vm1188, %v1324, %v1171
        %v1326 = vrot.slane %v1171, 4
        %v1327 = vsel %vm1188, %v1182, %v1326
        %v1329 = vunpack.c.l.s4 1983009808
        %v1330 = vunpack.c.0.s8 %v1329
        %v1331 = vperm.slane %v1325, %v1330
        %v1333 = vunpack.c.l.s4 1983009808
        %v1334 = vunpack.c.0.s8 %v1333
        %v1335 = vperm.slane %v1327, %v1334
        %v1336 = vrot.slane %v1185, 4
        %v1337 = vsel %vm1188, %v1336, %v1174
        %v1338 = vrot.slane %v1174, 4
        %v1339 = vsel %vm1188, %v1185, %v1338
        %v1341 = vunpack.c.l.s4 1983009808
        %v1342 = vunpack.c.0.s8 %v1341
        %v1343 = vperm.slane %v1337, %v1342
        %v1345 = vunpack.c.l.s4 1983009808
        %v1346 = vunpack.c.0.s8 %v1345
        %v1347 = vperm.slane %v1339, %v1346
        %v1348 = vrot.slane %v1319, 4
        %v1349 = vsel %vm1188, %v1348, %v1307
        %v1350 = vrot.slane %v1307, 4
        %v1351 = vsel %vm1188, %v1319, %v1350
        %v1353 = vunpack.c.l.s4 1934713408
        %v1354 = vunpack.c.0.s8 %v1353
        %v1355 = vperm.slane %v1349, %v1354
        %v1357 = vunpack.c.l.s4 1934713408
        %v1358 = vunpack.c.0.s8 %v1357
        %v1359 = vperm.slane %v1351, %v1358
        %v1360 = vrot.slane %v1323, 4
        %v1361 = vsel %vm1188, %v1360, %v1311
        %v1362 = vrot.slane %v1311, 4
        %v1363 = vsel %vm1188, %v1323, %v1362
        %v1365 = vunpack.c.l.s4 1934713408
        %v1366 = vunpack.c.0.s8 %v1365
        %v1367 = vperm.slane %v1361, %v1366
        %v1369 = vunpack.c.l.s4 1934713408
        %v1370 = vunpack.c.0.s8 %v1369
        %v1371 = vperm.slane %v1363, %v1370
        %v1372 = vrot.slane %v1343, 4
        %v1373 = vsel %vm1188, %v1372, %v1331
        %v1374 = vrot.slane %v1331, 4
        %v1375 = vsel %vm1188, %v1343, %v1374
        %v1377 = vunpack.c.l.s4 1934713408
        %v1378 = vunpack.c.0.s8 %v1377
        %v1379 = vperm.slane %v1373, %v1378
        %v1381 = vunpack.c.l.s4 1934713408
        %v1382 = vunpack.c.0.s8 %v1381
        %v1383 = vperm.slane %v1375, %v1382
        %v1384 = vrot.slane %v1347, 4
        %v1385 = vsel %vm1188, %v1384, %v1335
        %v1386 = vrot.slane %v1335, 4
        %v1387 = vsel %vm1188, %v1347, %v1386
        %v1389 = vunpack.c.l.s4 1934713408
        %v1390 = vunpack.c.0.s8 %v1389
        %v1391 = vperm.slane %v1385, %v1390
        %v1393 = vunpack.c.l.s4 1934713408
        %v1394 = vunpack.c.0.s8 %v1393
        %v1395 = vperm.slane %v1387, %v1394
        %v1396 = vrot.slane %v1379, 4
        %v1397 = vsel %vm1188, %v1396, %v1355
        %v1398 = vrot.slane %v1355, 4
        %v1399 = vsel %vm1188, %v1379, %v1398
        %v1400 = vrot.slane %v1383, 4
        %v1401 = vsel %vm1188, %v1400, %v1359
        %v1402 = vrot.slane %v1359, 4
        %v1403 = vsel %vm1188, %v1383, %v1402
        %v1404 = vrot.slane %v1391, 4
        %v1405 = vsel %vm1188, %v1404, %v1367
        %v1406 = vrot.slane %v1367, 4
        %v1407 = vsel %vm1188, %v1391, %v1406
        %v1408 = vrot.slane %v1395, 4
        %v1409 = vsel %vm1188, %v1408, %v1371
        %v1410 = vrot.slane %v1371, 4
        %v1411 = vsel %vm1188, %v1395, %v1410
        %v1412 = vrot.slane %v1289, 4
        %v1413 = vsel %vm1188, %v1412, %v1285
        %v1414 = vrot.slane %v1285, 4
        %v1415 = vsel %vm1188, %v1289, %v1414
        %v1417 = vunpack.c.l.s4 1983009808
        %v1418 = vunpack.c.0.s8 %v1417
        %v1419 = vperm.slane %v1413, %v1418
        %v1421 = vunpack.c.l.s4 1983009808
        %v1422 = vunpack.c.0.s8 %v1421
        %v1423 = vperm.slane %v1415, %v1422
        %v1424 = vrot.slane %v1291, 4
        %v1425 = vsel %vm1188, %v1424, %v1287
        %v1426 = vrot.slane %v1287, 4
        %v1427 = vsel %vm1188, %v1291, %v1426
        %v1429 = vunpack.c.l.s4 1983009808
        %v1430 = vunpack.c.0.s8 %v1429
        %v1431 = vperm.slane %v1425, %v1430
        %v1433 = vunpack.c.l.s4 1983009808
        %v1434 = vunpack.c.0.s8 %v1433
        %v1435 = vperm.slane %v1427, %v1434
        %v1436 = vrot.slane %v1297, 4
        %v1437 = vsel %vm1188, %v1436, %v1293
        %v1438 = vrot.slane %v1293, 4
        %v1439 = vsel %vm1188, %v1297, %v1438
        %v1441 = vunpack.c.l.s4 1983009808
        %v1442 = vunpack.c.0.s8 %v1441
        %v1443 = vperm.slane %v1437, %v1442
        %v1445 = vunpack.c.l.s4 1983009808
        %v1446 = vunpack.c.0.s8 %v1445
        %v1447 = vperm.slane %v1439, %v1446
        %v1448 = vrot.slane %v1299, 4
        %v1449 = vsel %vm1188, %v1448, %v1295
        %v1450 = vrot.slane %v1295, 4
        %v1451 = vsel %vm1188, %v1299, %v1450
        %v1453 = vunpack.c.l.s4 1983009808
        %v1454 = vunpack.c.0.s8 %v1453
        %v1455 = vperm.slane %v1449, %v1454
        %v1457 = vunpack.c.l.s4 1983009808
        %v1458 = vunpack.c.0.s8 %v1457
        %v1459 = vperm.slane %v1451, %v1458
        %v1460 = vrot.slane %v1431, 4
        %v1461 = vsel %vm1188, %v1460, %v1419
        %v1462 = vrot.slane %v1419, 4
        %v1463 = vsel %vm1188, %v1431, %v1462
        %v1465 = vunpack.c.l.s4 1934713408
        %v1466 = vunpack.c.0.s8 %v1465
        %v1467 = vperm.slane %v1461, %v1466
        %v1469 = vunpack.c.l.s4 1934713408
        %v1470 = vunpack.c.0.s8 %v1469
        %v1471 = vperm.slane %v1463, %v1470
        %v1472 = vrot.slane %v1435, 4
        %v1473 = vsel %vm1188, %v1472, %v1423
        %v1474 = vrot.slane %v1423, 4
        %v1475 = vsel %vm1188, %v1435, %v1474
        %v1477 = vunpack.c.l.s4 1934713408
        %v1478 = vunpack.c.0.s8 %v1477
        %v1479 = vperm.slane %v1473, %v1478
        %v1481 = vunpack.c.l.s4 1934713408
        %v1482 = vunpack.c.0.s8 %v1481
        %v1483 = vperm.slane %v1475, %v1482
        %v1484 = vrot.slane %v1455, 4
        %v1485 = vsel %vm1188, %v1484, %v1443
        %v1486 = vrot.slane %v1443, 4
        %v1487 = vsel %vm1188, %v1455, %v1486
        %v1489 = vunpack.c.l.s4 1934713408
        %v1490 = vunpack.c.0.s8 %v1489
        %v1491 = vperm.slane %v1485, %v1490
        %v1493 = vunpack.c.l.s4 1934713408
        %v1494 = vunpack.c.0.s8 %v1493
        %v1495 = vperm.slane %v1487, %v1494
        %v1496 = vrot.slane %v1459, 4
        %v1497 = vsel %vm1188, %v1496, %v1447
        %v1498 = vrot.slane %v1447, 4
        %v1499 = vsel %vm1188, %v1459, %v1498
        %v1501 = vunpack.c.l.s4 1934713408
        %v1502 = vunpack.c.0.s8 %v1501
        %v1503 = vperm.slane %v1497, %v1502
        %v1505 = vunpack.c.l.s4 1934713408
        %v1506 = vunpack.c.0.s8 %v1505
        %v1507 = vperm.slane %v1499, %v1506
        %v1508 = vrot.slane %v1491, 4
        %v1509 = vsel %vm1188, %v1508, %v1467
        %v1510 = vrot.slane %v1467, 4
        %v1511 = vsel %vm1188, %v1491, %v1510
        %v1512 = vrot.slane %v1495, 4
        %v1513 = vsel %vm1188, %v1512, %v1471
        %v1514 = vrot.slane %v1471, 4
        %v1515 = vsel %vm1188, %v1495, %v1514
        %v1516 = vrot.slane %v1503, 4
        %v1517 = vsel %vm1188, %v1516, %v1479
        %v1518 = vrot.slane %v1479, 4
        %v1519 = vsel %vm1188, %v1503, %v1518
        %v1520 = vrot.slane %v1507, 4
        %v1521 = vsel %vm1188, %v1520, %v1483
        %v1522 = vrot.slane %v1483, 4
        %v1523 = vsel %vm1188, %v1507, %v1522
        %v1524 = vrot.slane %v1401, 4
        %v1525 = vsel %vm1188, %v1524, %v1397
        %v1526 = vrot.slane %v1397, 4
        %v1527 = vsel %vm1188, %v1401, %v1526
        %v1529 = vunpack.c.l.s4 1983009808
        %v1530 = vunpack.c.0.s8 %v1529
        %v1531 = vperm.slane %v1525, %v1530
        %v1533 = vunpack.c.l.s4 1983009808
        %v1534 = vunpack.c.0.s8 %v1533
        %v1535 = vperm.slane %v1527, %v1534
        %v1536 = vrot.slane %v1403, 4
        %v1537 = vsel %vm1188, %v1536, %v1399
        %v1538 = vrot.slane %v1399, 4
        %v1539 = vsel %vm1188, %v1403, %v1538
        %v1541 = vunpack.c.l.s4 1983009808
        %v1542 = vunpack.c.0.s8 %v1541
        %v1543 = vperm.slane %v1537, %v1542
        %v1545 = vunpack.c.l.s4 1983009808
        %v1546 = vunpack.c.0.s8 %v1545
        %v1547 = vperm.slane %v1539, %v1546
        %v1548 = vrot.slane %v1409, 4
        %v1549 = vsel %vm1188, %v1548, %v1405
        %v1550 = vrot.slane %v1405, 4
        %v1551 = vsel %vm1188, %v1409, %v1550
        %v1553 = vunpack.c.l.s4 1983009808
        %v1554 = vunpack.c.0.s8 %v1553
        %v1555 = vperm.slane %v1549, %v1554
        %v1557 = vunpack.c.l.s4 1983009808
        %v1558 = vunpack.c.0.s8 %v1557
        %v1559 = vperm.slane %v1551, %v1558
        %v1560 = vrot.slane %v1411, 4
        %v1561 = vsel %vm1188, %v1560, %v1407
        %v1562 = vrot.slane %v1407, 4
        %v1563 = vsel %vm1188, %v1411, %v1562
        %v1565 = vunpack.c.l.s4 1983009808
        %v1566 = vunpack.c.0.s8 %v1565
        %v1567 = vperm.slane %v1561, %v1566
        %v1569 = vunpack.c.l.s4 1983009808
        %v1570 = vunpack.c.0.s8 %v1569
        %v1571 = vperm.slane %v1563, %v1570
        %v1572 = vrot.slane %v1543, 4
        %v1573 = vsel %vm1188, %v1572, %v1531
        %v1574 = vrot.slane %v1531, 4
        %v1575 = vsel %vm1188, %v1543, %v1574
        %v1577 = vunpack.c.l.s4 1934713408
        %v1578 = vunpack.c.0.s8 %v1577
        %v1579 = vperm.slane %v1573, %v1578
        %v1581 = vunpack.c.l.s4 1934713408
        %v1582 = vunpack.c.0.s8 %v1581
        %v1583 = vperm.slane %v1575, %v1582
        %v1584 = vrot.slane %v1547, 4
        %v1585 = vsel %vm1188, %v1584, %v1535
        %v1586 = vrot.slane %v1535, 4
        %v1587 = vsel %vm1188, %v1547, %v1586
        %v1589 = vunpack.c.l.s4 1934713408
        %v1590 = vunpack.c.0.s8 %v1589
        %v1591 = vperm.slane %v1585, %v1590
        %v1593 = vunpack.c.l.s4 1934713408
        %v1594 = vunpack.c.0.s8 %v1593
        %v1595 = vperm.slane %v1587, %v1594
        %v1596 = vrot.slane %v1567, 4
        %v1597 = vsel %vm1188, %v1596, %v1555
        %v1598 = vrot.slane %v1555, 4
        %v1599 = vsel %vm1188, %v1567, %v1598
        %v1601 = vunpack.c.l.s4 1934713408
        %v1602 = vunpack.c.0.s8 %v1601
        %v1603 = vperm.slane %v1597, %v1602
        %v1605 = vunpack.c.l.s4 1934713408
        %v1606 = vunpack.c.0.s8 %v1605
        %v1607 = vperm.slane %v1599, %v1606
        %v1608 = vrot.slane %v1571, 4
        %v1609 = vsel %vm1188, %v1608, %v1559
        %v1610 = vrot.slane %v1559, 4
        %v1611 = vsel %vm1188, %v1571, %v1610
        %v1613 = vunpack.c.l.s4 1934713408
        %v1614 = vunpack.c.0.s8 %v1613
        %v1615 = vperm.slane %v1609, %v1614
        %v1617 = vunpack.c.l.s4 1934713408
        %v1618 = vunpack.c.0.s8 %v1617
        %v1619 = vperm.slane %v1611, %v1618
        %v1620 = vrot.slane %v1603, 4
        %v1621 = vsel %vm1188, %v1620, %v1579
        %v1622 = vrot.slane %v1579, 4
        %v1623 = vsel %vm1188, %v1603, %v1622
        %v1624 = vrot.slane %v1607, 4
        %v1625 = vsel %vm1188, %v1624, %v1583
        %v1626 = vrot.slane %v1583, 4
        %v1627 = vsel %vm1188, %v1607, %v1626
        %v1628 = vrot.slane %v1615, 4
        %v1629 = vsel %vm1188, %v1628, %v1591
        %v1630 = vrot.slane %v1591, 4
        %v1631 = vsel %vm1188, %v1615, %v1630
        %v1632 = vrot.slane %v1619, 4
        %v1633 = vsel %vm1188, %v1632, %v1595
        %v1634 = vrot.slane %v1595, 4
        %v1635 = vsel %vm1188, %v1619, %v1634
        %1637 = vrot.lane.b32.xlu0 %v1511, 16
        %v1638 = vpop.permute.xlu0 %1637
        %1641 = vrot.lane.b32.xlu0 %v1513, 32
        %v1642 = vpop.permute.xlu0 %1641
        %1645 = vrot.lane.b32.xlu0 %v1515, 48
        %v1646 = vpop.permute.xlu0 %1645
        %1649 = vrot.lane.b32.xlu0 %v1517, 64
        %v1650 = vpop.permute.xlu0 %1649
        %1653 = vrot.lane.b32.xlu0 %v1519, 80
        %v1654 = vpop.permute.xlu0 %1653
        %1657 = vrot.lane.b32.xlu0 %v1521, 96
        %v1658 = vpop.permute.xlu0 %1657
        %1661 = vrot.lane.b32.xlu0 %v1523, 112
        %v1662 = vpop.permute.xlu0 %1661
        %1665 = vrot.lane.b32.xlu0 %v1623, 16
        %v1666 = vpop.permute.xlu0 %1665
        %1669 = vrot.lane.b32.xlu0 %v1625, 32
        %v1670 = vpop.permute.xlu0 %1669
        %1673 = vrot.lane.b32.xlu0 %v1627, 48
        %v1674 = vpop.permute.xlu0 %1673
        %1677 = vrot.lane.b32.xlu0 %v1629, 64
        %v1678 = vpop.permute.xlu0 %1677
        %1681 = vrot.lane.b32.xlu0 %v1631, 80
        %v1682 = vpop.permute.xlu0 %1681
        %1685 = vrot.lane.b32.xlu0 %v1633, 96
        %v1686 = vpop.permute.xlu0 %1685
        %1689 = vrot.lane.b32.xlu0 %v1635, 112
        %v1690 = vpop.permute.xlu0 %1689
        %vm1692 = vcmask 130048
        %v1693 = vsel %vm1692, %v1509, %v1638
        %vm1694 = vcmask 261120
        %v1695 = vsel %vm1694, %v1693, %v1642
        %vm1696 = vcmask 392192
        %v1697 = vsel %vm1696, %v1695, %v1646
        %vm1698 = vcmask 523264
        %v1699 = vsel %vm1698, %v1697, %v1650
        %vm1700 = vcmask 654336
        %v1701 = vsel %vm1700, %v1699, %v1654
        %vm1702 = vcmask 785408
        %v1703 = vsel %vm1702, %v1701, %v1658
        %vm1704 = vcmask 916480
        %v1705 = vsel %vm1704, %v1703, %v1662
        %v1706 = vsel %vm1692, %v1621, %v1666
        %v1707 = vsel %vm1694, %v1706, %v1670
        %v1708 = vsel %vm1696, %v1707, %v1674
        %v1709 = vsel %vm1698, %v1708, %v1678
        %v1710 = vsel %vm1700, %v1709, %v1682
        %v1711 = vsel %vm1702, %v1710, %v1686
        %v1712 = vsel %vm1704, %v1711, %v1690
        %1713 = vst [vmem:[%s225] sm:$0xff] %v1705
        %1714 = vst [vmem:[%s225 + $0x8] sm:$0xff] %v1712
      $region40: #{forward.1} parent=27 // pred_fallthru
        _
      %p1715 = scmp.lt.s32.totalorder %s18, 1
      %s1716 = scalar_select %p1715, %s18, 1
      %p1717 = scmp.lt.s32.totalorder %s19, 0
      %s1718 = scalar_select %p1717, %s19, 0
      %s1719 = smul.addr %s1718, 2
      %s1720 = smul.addr %s1716, 2
      %s1721 = sadd.s32 %s1719, %s1720
      %s1722 = smul.addr %s1721, 8
      %s1723 = scalar_lea.vmem %s2, %s1722
      // Predicated region
      $region41: #{forward.1} parent=27 // pred_check
        %p1724 = pneg %p110
      $region42: #{forward.1} parent=27 // pred_check_branch
        %1726 = sbr.rel (%p1724) target = $region44
      $region43: #{forward.1} parent=27 // pred_region
        _
      $region44: #{forward.1} parent=27 // pred_fallthru
        _
    $region28: #{forward.1} parent=5 // pred_fallthru
      _
    %p1727 = scmp.le.s32.totalorder 2, %s8
    // Predicated region
    $region45: #{forward.1} parent=5 // pred_check
      %p1728 = pneg %p1727
    $region46: #{forward.1} parent=5 // pred_check_branch
      %1730 = sbr.rel (%p1728) target = $region48
    $region47: #{forward.1} parent=5 // pred_region
      %s1731 = ssub.s32 %s8, 2
      // Predicated region
      $region49: #{forward.1} parent=47 // pred_check
        %p1732 = pneg %p116
      $region50: #{forward.1} parent=47 // pred_check_branch
        %1734 = sbr.rel (%p1732) target = $region52
      $region51: #{forward.1} parent=47 // pred_region
        %p1735 = scmp.lt.s32.totalorder %s21, 1
        %s1736 = scalar_select %p1735, %s21, 1
        %p1737 = scmp.lt.s32.totalorder %s22, 0
        %s1738 = scalar_select %p1737, %s22, 0
        %s1739 = smul.addr %s1738, 2
        %s1740 = smul.addr %s1736, 2
        %s1741 = sadd.s32 %s1739, %s1740
        %s1742 = smul.addr %s1741, 8
        %s1743 = scalar_lea.vmem %s2, %s1742
      $region52: #{forward.1} parent=47 // pred_fallthru
        _
    $region48: #{forward.1} parent=5 // pred_fallthru
      _
  $region6: #{forward.1} parent=0 // loop_footer
    %s12 = sadd.s32 1, %s8
  $region7: #{forward.1} parent=0 // loop_footer_branch
    %7 = sbr.rel target = $region3
  $region8: #{forward.1} parent=0 // loop_exit
    _

</llo_original>
